<compile_context>
chip_gen: v7x
topology: tpu7x:2x2x1
jax: 0.10.0
libtpu: 0.0.40
codegen_flags: <defaults>
</compile_context>

<pallas_src>
import jax
import jax.numpy as jnp
from jax.experimental import pallas as pl
from jax.experimental.pallas import tpu as pltpu

EPS = 1e-6          # LayerNorm2d epsilon (NAFNet convention)
NEG_INF = -1e30     # masked (cross-image-row) attention logit


def _pick_row_group(H, W):
    """Smallest divisor G of H such that G*W is a multiple of 128 (lane-dense
    attention tiles); falls back to the whole image if none exists."""
    for g in range(1, H + 1):
        if H % g == 0 and (g * W) % 128 == 0:
            return g
    return H


def scam_kernel(xl_ref, xr_ref, w_ref, b_ref, vec_ref, rid_i_ref, rid_j_ref,
                out_ref):
    """One grid step = one row group (G image rows) of one image pair.

    xl_ref, xr_ref : (1, C, GW)   inputs, GW = G*W (channels on sublanes)
    w_ref          : (4C, 4C)     block-diag conv1x1 weights [lp1*scale, rp1, lp2, rp2]
    b_ref          : (4C, 1)      matching stacked biases (scale folded into lp1)
    vec_ref        : (2C, 3)      columns = [ln_w, ln_b, beta|gamma]; [:C]=left, [C:]=right
    rid_i_ref      : (GW, 1) i32  image-row id of each left pixel in the group
    rid_j_ref      : (1, GW) i32  image-row id of each right pixel in the group
    out_ref        : (1, 2C, GW)  [:C] = left output, [C:] = right output
    """
    C = xl_ref.shape[1]

    xl = xl_ref[0].astype(jnp.float32)                       # (C, GW)
    xr = xr_ref[0].astype(jnp.float32)                       # (C, GW)
    vecs = vec_ref[...].astype(jnp.float32)                  # (2C, 3)
    ln_w, ln_b, bg = vecs[:, 0:1], vecs[:, 1:2], vecs[:, 2:3]

    inv_c = 1.0 / C

    def layernorm(x, w, b):                                   # per pixel over channels
        mu = jnp.sum(x, axis=0, keepdims=True) * inv_c        # XLU sublane reduce
        xc = x - mu
        var = jnp.sum(xc * xc, axis=0, keepdims=True) * inv_c
        return xc * jax.lax.rsqrt(var + EPS) * w + b

    nl = layernorm(xl, ln_w[0:C], ln_b[0:C])
    nr = layernorm(xr, ln_w[C:], ln_b[C:])

    # Fused 1x1-conv projections: one block-diagonal (4C,4C) @ (4C,GW) matmul.
    stacked = jnp.concatenate([nl, nr, xl, xr], axis=0)       # (4C, GW)
    proj = jnp.dot(w_ref[...].astype(jnp.float32), stacked,
                   preferred_element_type=jnp.float32) + b_ref[...].astype(jnp.float32)
    q_l = proj[0:C]                                           # attention scale folded in
    q_r = proj[C:2 * C]
    v_l = proj[2 * C:3 * C]
    v_r = proj[3 * C:4 * C]

    # Single QK matmul shared by both attention directions.
    # logits[i, j] = sum_c q_l[c, i] * q_r[c, j]   (i = left pixel, j = right pixel)
    logits = jax.lax.dot_general(q_l, q_r, (((0,), (0,)), ((), ())),
                                 preferred_element_type=jnp.float32)    # (GW, GW)
    same_row = rid_i_ref[...] == rid_j_ref[...]                # block-diag row mask
    logits = jnp.where(same_row, logits, NEG_INF)

    # ---- right -> left: softmax over right pixels (axis -1); finished fully before
    # the l2r path so at most ~2 (GW,GW) f32 temporaries are live at once.
    m_r = jnp.max(logits, axis=1, keepdims=True)
    e_r = jnp.exp(logits - m_r)
    a_r2l = e_r * pl.reciprocal(jnp.sum(e_r, axis=1, keepdims=True), approx=False)
    # f_r2l[c, i] = sum_j v_r[c, j] * a_r2l[i, j]
    f_r2l = jax.lax.dot_general(v_r, a_r2l, (((1,), (1,)), ((), ())),
                                preferred_element_type=jnp.float32)     # (C, GW)

    # ---- left -> right: the transpose of the same masked logits (mask is symmetric),
    # realized as a softmax over axis 0 -- no second QK matmul, no materialized transpose.
    m_l = jnp.max(logits, axis=0, keepdims=True)
    e_l = jnp.exp(logits - m_l)
    a_l2r = e_l * pl.reciprocal(jnp.sum(e_l, axis=0, keepdims=True), approx=False)
    # f_l2r[c, j] = sum_i v_l[c, i] * a_l2r[i, j]
    f_l2r = jnp.dot(v_l, a_l2r, preferred_element_type=jnp.float32)     # (C, GW)

    out = jnp.concatenate([xl + bg[0:C] * f_r2l, xr + bg[C:] * f_l2r], axis=0)
    out_ref[0] = out.astype(out_ref.dtype)     # one sublane-aligned (2C, GW) store


def scam_forward(x_l, x_r, p):
    """x_l, x_r: (B, C, H, W) NCHW (PyTorch convention). Returns (B, 2C, H, W)."""
    B, C, H, W = x_l.shape
    P = H * W
    G = _pick_row_group(H, W)
    GW = G * W
    scale = float(C) ** (-0.5)
    f32 = jnp.float32

    # Free, contiguous reshapes only (no transposes / concat of the image data).
    xl = x_l.reshape(B, C, P)
    xr = x_r.reshape(B, C, P)

    # Block-diagonal fused projection weight; attention scale folded into lp1.
    blocks = [p["lp1_w"].astype(f32) * scale, p["rp1_w"].astype(f32),
              p["lp2_w"].astype(f32), p["rp2_w"].astype(f32)]
    w_bd = jnp.zeros((4 * C, 4 * C), f32)
    for k, blk in enumerate(blocks):
        w_bd = w_bd.at[k * C:(k + 1) * C, k * C:(k + 1) * C].set(blk)
    b_bd = jnp.concatenate([p["lp1_b"].astype(f32) * scale, p["rp1_b"].astype(f32),
                            p["lp2_b"].astype(f32), p["rp2_b"].astype(f32)]
                           ).reshape(4 * C, 1)

    vec = jnp.stack([jnp.concatenate([p["ln_l_w"], p["ln_r_w"]]),
                     jnp.concatenate([p["ln_l_b"], p["ln_r_b"]]),
                     jnp.concatenate([p["beta"], p["gamma"]])],
                    axis=1).astype(f32)                         # (2C, 3)

    # Tiny per-pixel image-row ids (replace the old (P,P) HBM bias array).
    rid = jnp.arange(GW, dtype=jnp.int32) // W
    rid_i = rid.reshape(GW, 1)
    rid_j = rid.reshape(1, GW)

    x_spec = pl.BlockSpec((1, C, GW), lambda b, g: (b, 0, g))

    out = pl.pallas_call(
        scam_kernel,
        out_shape=jax.ShapeDtypeStruct((B, 2 * C, P), x_l.dtype),
        grid_spec=pltpu.PrefetchScalarGridSpec(
            num_scalar_prefetch=0,
            grid=(B, H // G),
            in_specs=[
                x_spec, x_spec,
                pl.BlockSpec((4 * C, 4 * C), lambda b, g: (0, 0)),
                pl.BlockSpec((4 * C, 1), lambda b, g: (0, 0)),
                pl.BlockSpec((2 * C, 3), lambda b, g: (0, 0)),
                pl.BlockSpec((GW, 1), lambda b, g: (0, 0)),
                pl.BlockSpec((1, GW), lambda b, g: (0, 0)),
            ],
            out_specs=pl.BlockSpec((1, 2 * C, GW), lambda b, g: (b, 0, g)),
        ),
        # Per-step VMEM is small (O(GW^2) f32 temporaries, ~200 KiB at GW=128),
        # so the default scoped VMEM limit is plenty on v5e/v6e/v7x.
        compiler_params=pltpu.CompilerParams(
            dimension_semantics=("parallel", "parallel")),
    )(xl, xr, w_bd, b_bd, vec, rid_i, rid_j)

    return out.reshape(B, 2 * C, H, W)


def scam_reference(x_l, x_r, p):
    """Pure-JAX NCHW reference mirroring the PyTorch forward."""
    C = x_l.shape[1]
    scale = C ** (-0.5)

    def ln(x, w, b):
        mu = x.mean(axis=1, keepdims=True)
        var = ((x - mu) ** 2).mean(axis=1, keepdims=True)
        y = (x - mu) / jnp.sqrt(var + EPS)
        return y * w[None, :, None, None] + b[None, :, None, None]

    def conv1x1(x, w, b):  # w: (Cout, Cin)
        return jnp.einsum("bchw,oc->bohw", x, w) + b[None, :, None, None]

    Q_l = conv1x1(ln(x_l, p["ln_l_w"], p["ln_l_b"]), p["lp1_w"], p["lp1_b"]).transpose(0, 2, 3, 1)
    Q_r_T = conv1x1(ln(x_r, p["ln_r_w"], p["ln_r_b"]), p["rp1_w"], p["rp1_b"]).transpose(0, 2, 1, 3)
    V_l = conv1x1(x_l, p["lp2_w"], p["lp2_b"]).transpose(0, 2, 3, 1)
    V_r = conv1x1(x_r, p["rp2_w"], p["rp2_b"]).transpose(0, 2, 3, 1)

    attn = jnp.matmul(Q_l, Q_r_T) * scale
    F_r2l = jnp.matmul(jax.nn.softmax(attn, axis=-1), V_r)
    F_l2r = jnp.matmul(jax.nn.softmax(attn.transpose(0, 1, 3, 2), axis=-1), V_l)
    F_r2l = F_r2l.transpose(0, 3, 1, 2) * p["beta"][None, :, None, None]
    F_l2r = F_l2r.transpose(0, 3, 1, 2) * p["gamma"][None, :, None, None]
    return jnp.concatenate([x_l + F_r2l, x_r + F_l2r], axis=1)


if __name__ == "__main__":
    B, C, H, W = 2, 4, 16, 16
    key = jax.random.PRNGKey(0)
    keys = jax.random.split(key, 16)

    x_l = jax.random.normal(keys[0], (B, C, H, W), jnp.float32)
    x_r = jax.random.normal(keys[1], (B, C, H, W), jnp.float32)

    # Deterministic parameter init (shapes from SCAM.__init__).
    # NOTE: the module inits beta/gamma to zeros; here they are set to small
    # random values so the attention path actually contributes to the output.
    params = {
        "ln_l_w": jnp.ones((C,), jnp.float32),
        "ln_l_b": jnp.zeros((C,), jnp.float32),
        "ln_r_w": jnp.ones((C,), jnp.float32),
        "ln_r_b": jnp.zeros((C,), jnp.float32),
        "lp1_w": 0.2 * jax.random.normal(keys[2], (C, C), jnp.float32),
        "lp1_b": 0.1 * jax.random.normal(keys[3], (C,), jnp.float32),
        "rp1_w": 0.2 * jax.random.normal(keys[4], (C, C), jnp.float32),
        "rp1_b": 0.1 * jax.random.normal(keys[5], (C,), jnp.float32),
        "lp2_w": 0.2 * jax.random.normal(keys[6], (C, C), jnp.float32),
        "lp2_b": 0.1 * jax.random.normal(keys[7], (C,), jnp.float32),
        "rp2_w": 0.2 * jax.random.normal(keys[8], (C, C), jnp.float32),
        "rp2_b": 0.1 * jax.random.normal(keys[9], (C,), jnp.float32),
        "beta": 0.5 * jax.random.normal(keys[10], (C,), jnp.float32),
        "gamma": 0.5 * jax.random.normal(keys[11], (C,), jnp.float32),
    }

    out = jax.block_until_ready(scam_forward(x_l, x_r, params))
    ref = jax.block_until_ready(scam_reference(x_l, x_r, params))

    assert out.shape == (B, 2 * C, H, W), out.shape
    assert jnp.allclose(out, ref, atol=5e-5, rtol=5e-5), (
        float(jnp.max(jnp.abs(out - ref))))
    print("KERNEL_OK")
</pallas_src>

<mosaic_0001>
module attributes {stable_mosaic.version = 11 : i64} {
  func.func @scam_kernel(%arg0: i32, %arg1: i32, %arg2: memref<1x4x128xf32, #tpu.memory_space<vmem>>, %arg3: memref<1x4x128xf32, #tpu.memory_space<vmem>>, %arg4: memref<16x16xf32, #tpu.memory_space<vmem>>, %arg5: memref<16x1xf32, #tpu.memory_space<vmem>>, %arg6: memref<8x3xf32, #tpu.memory_space<vmem>>, %arg7: memref<128x1xi32, #tpu.memory_space<vmem>>, %arg8: memref<1x128xi32, #tpu.memory_space<vmem>>, %arg9: memref<1x8x128xf32, #tpu.memory_space<vmem>>) attributes {dimension_semantics = [#tpu.dimension_semantics<parallel>, #tpu.dimension_semantics<parallel>], iteration_bounds = array<i64: 2, 2>, scalar_prefetch = 0 : i64, scratch_operands = 0 : i64, tpu.core_type = #tpu.core_type<tc>, window_params = [{transform_indices = @transform_0, window_bounds = array<i64: 1, 4, 128>}, {transform_indices = @transform_1, window_bounds = array<i64: 1, 4, 128>}, {pipeline_mode = #tpu.pipeline_mode<synchronous>, transform_indices = @transform_2, window_bounds = array<i64: 16, 16>}, {pipeline_mode = #tpu.pipeline_mode<synchronous>, transform_indices = @transform_3, window_bounds = array<i64: 16, 1>}, {pipeline_mode = #tpu.pipeline_mode<synchronous>, transform_indices = @transform_4, window_bounds = array<i64: 8, 3>}, {pipeline_mode = #tpu.pipeline_mode<synchronous>, transform_indices = @transform_5, window_bounds = array<i64: 128, 1>}, {pipeline_mode = #tpu.pipeline_mode<synchronous>, transform_indices = @transform_6, window_bounds = array<i64: 1, 128>}, {transform_indices = @transform_7, window_bounds = array<i64: 1, 8, 128>}]} {
    %c0 = arith.constant 0 : index
    %c0_0 = arith.constant 0 : index
    %c0_1 = arith.constant 0 : index
    %0 = vector.load %arg2[%c0, %c0_0, %c0_1] : memref<1x4x128xf32, #tpu.memory_space<vmem>>, vector<1x4x128xf32>
    %1 = vector.shape_cast %0 : vector<1x4x128xf32> to vector<4x128xf32>
    %c0_2 = arith.constant 0 : index
    %c0_3 = arith.constant 0 : index
    %c0_4 = arith.constant 0 : index
    %2 = vector.load %arg3[%c0_2, %c0_3, %c0_4] : memref<1x4x128xf32, #tpu.memory_space<vmem>>, vector<1x4x128xf32>
    %3 = vector.shape_cast %2 : vector<1x4x128xf32> to vector<4x128xf32>
    %c0_5 = arith.constant 0 : index
    %c0_6 = arith.constant 0 : index
    %4 = vector.load %arg6[%c0_5, %c0_6] : memref<8x3xf32, #tpu.memory_space<vmem>>, vector<8x3xf32>
    %5 = vector.extract_strided_slice %4 {offsets = [0, 0], sizes = [8, 1], strides = [1, 1]} : vector<8x3xf32> to vector<8x1xf32>
    %6 = vector.extract_strided_slice %4 {offsets = [0, 1], sizes = [8, 1], strides = [1, 1]} : vector<8x3xf32> to vector<8x1xf32>
    %7 = vector.extract_strided_slice %4 {offsets = [0, 2], sizes = [8, 1], strides = [1, 1]} : vector<8x3xf32> to vector<8x1xf32>
    %8 = vector.extract_strided_slice %5 {offsets = [0, 0], sizes = [4, 1], strides = [1, 1]} : vector<8x1xf32> to vector<4x1xf32>
    %9 = vector.extract_strided_slice %6 {offsets = [0, 0], sizes = [4, 1], strides = [1, 1]} : vector<8x1xf32> to vector<4x1xf32>
    %cst = arith.constant dense<0.000000e+00> : vector<128xf32>
    %10 = vector.multi_reduction <add>, %1, %cst [0] : vector<4x128xf32> to vector<128xf32>
    %11 = vector.shape_cast %10 : vector<128xf32> to vector<1x128xf32>
    %cst_7 = arith.constant 2.500000e-01 : f32
    %12 = vector.broadcast %cst_7 : f32 to vector<1x128xf32>
    %13 = arith.mulf %11, %12 : vector<1x128xf32>
    %14 = vector.broadcast %13 : vector<1x128xf32> to vector<4x128xf32>
    %15 = arith.subf %1, %14 : vector<4x128xf32>
    %16 = arith.mulf %15, %15 : vector<4x128xf32>
    %cst_8 = arith.constant dense<0.000000e+00> : vector<128xf32>
    %17 = vector.multi_reduction <add>, %16, %cst_8 [0] : vector<4x128xf32> to vector<128xf32>
    %18 = vector.shape_cast %17 : vector<128xf32> to vector<1x128xf32>
    %cst_9 = arith.constant 2.500000e-01 : f32
    %19 = vector.broadcast %cst_9 : f32 to vector<1x128xf32>
    %20 = arith.mulf %18, %19 : vector<1x128xf32>
    %cst_10 = arith.constant 9.99999997E-7 : f32
    %21 = vector.broadcast %cst_10 : f32 to vector<1x128xf32>
    %22 = arith.addf %20, %21 : vector<1x128xf32>
    %23 = math.rsqrt %22 : vector<1x128xf32>
    %24 = vector.broadcast %23 : vector<1x128xf32> to vector<4x128xf32>
    %25 = arith.mulf %15, %24 : vector<4x128xf32>
    %26 = vector.broadcast %8 : vector<4x1xf32> to vector<4x128xf32>
    %27 = arith.mulf %25, %26 : vector<4x128xf32>
    %28 = vector.broadcast %9 : vector<4x1xf32> to vector<4x128xf32>
    %29 = arith.addf %27, %28 : vector<4x128xf32>
    %30 = vector.extract_strided_slice %5 {offsets = [4, 0], sizes = [4, 1], strides = [1, 1]} : vector<8x1xf32> to vector<4x1xf32>
    %31 = vector.extract_strided_slice %6 {offsets = [4, 0], sizes = [4, 1], strides = [1, 1]} : vector<8x1xf32> to vector<4x1xf32>
    %cst_11 = arith.constant dense<0.000000e+00> : vector<128xf32>
    %32 = vector.multi_reduction <add>, %3, %cst_11 [0] : vector<4x128xf32> to vector<128xf32>
    %33 = vector.shape_cast %32 : vector<128xf32> to vector<1x128xf32>
    %cst_12 = arith.constant 2.500000e-01 : f32
    %34 = vector.broadcast %cst_12 : f32 to vector<1x128xf32>
    %35 = arith.mulf %33, %34 : vector<1x128xf32>
    %36 = vector.broadcast %35 : vector<1x128xf32> to vector<4x128xf32>
    %37 = arith.subf %3, %36 : vector<4x128xf32>
    %38 = arith.mulf %37, %37 : vector<4x128xf32>
    %cst_13 = arith.constant dense<0.000000e+00> : vector<128xf32>
    %39 = vector.multi_reduction <add>, %38, %cst_13 [0] : vector<4x128xf32> to vector<128xf32>
    %40 = vector.shape_cast %39 : vector<128xf32> to vector<1x128xf32>
    %cst_14 = arith.constant 2.500000e-01 : f32
    %41 = vector.broadcast %cst_14 : f32 to vector<1x128xf32>
    %42 = arith.mulf %40, %41 : vector<1x128xf32>
    %cst_15 = arith.constant 9.99999997E-7 : f32
    %43 = vector.broadcast %cst_15 : f32 to vector<1x128xf32>
    %44 = arith.addf %42, %43 : vector<1x128xf32>
    %45 = math.rsqrt %44 : vector<1x128xf32>
    %46 = vector.broadcast %45 : vector<1x128xf32> to vector<4x128xf32>
    %47 = arith.mulf %37, %46 : vector<4x128xf32>
    %48 = vector.broadcast %30 : vector<4x1xf32> to vector<4x128xf32>
    %49 = arith.mulf %47, %48 : vector<4x128xf32>
    %50 = vector.broadcast %31 : vector<4x1xf32> to vector<4x128xf32>
    %51 = arith.addf %49, %50 : vector<4x128xf32>
    %52 = tpu.concatenate %29, %51, %1, %3 in 0 : vector<4x128xf32>, vector<4x128xf32>, vector<4x128xf32>, vector<4x128xf32> -> vector<16x128xf32>
    %c0_16 = arith.constant 0 : index
    %c0_17 = arith.constant 0 : index
    %53 = vector.load %arg4[%c0_16, %c0_17] : memref<16x16xf32, #tpu.memory_space<vmem>>, vector<16x16xf32>
    %cst_18 = arith.constant dense<0.000000e+00> : vector<16x128xf32>
    %54 = tpu.matmul %53, %52, %cst_18 {dimension_numbers = #tpu.dot_dimension_numbers<[1], [0], [0], [1], [0, 0, 1, 1], [], []>} : vector<16x16xf32>, vector<16x128xf32>, vector<16x128xf32> -> vector<16x128xf32>
    %c0_19 = arith.constant 0 : index
    %c0_20 = arith.constant 0 : index
    %55 = vector.load %arg5[%c0_19, %c0_20] : memref<16x1xf32, #tpu.memory_space<vmem>>, vector<16x1xf32>
    %56 = vector.broadcast %55 : vector<16x1xf32> to vector<16x128xf32>
    %57 = arith.addf %54, %56 : vector<16x128xf32>
    %58 = vector.extract_strided_slice %57 {offsets = [0, 0], sizes = [4, 128], strides = [1, 1]} : vector<16x128xf32> to vector<4x128xf32>
    %59 = vector.extract_strided_slice %57 {offsets = [4, 0], sizes = [4, 128], strides = [1, 1]} : vector<16x128xf32> to vector<4x128xf32>
    %60 = vector.extract_strided_slice %57 {offsets = [8, 0], sizes = [4, 128], strides = [1, 1]} : vector<16x128xf32> to vector<4x128xf32>
    %61 = vector.extract_strided_slice %57 {offsets = [12, 0], sizes = [4, 128], strides = [1, 1]} : vector<16x128xf32> to vector<4x128xf32>
    %cst_21 = arith.constant dense<0.000000e+00> : vector<128x128xf32>
    %62 = tpu.matmul %58, %59, %cst_21 {dimension_numbers = #tpu.dot_dimension_numbers<[0], [0], [1], [1], [0, 1, 1, 1], [], []>} : vector<4x128xf32>, vector<4x128xf32>, vector<128x128xf32> -> vector<128x128xf32>
    %c0_22 = arith.constant 0 : index
    %c0_23 = arith.constant 0 : index
    %63 = vector.load %arg7[%c0_22, %c0_23] : memref<128x1xi32, #tpu.memory_space<vmem>>, vector<128x1xi32>
    %c0_24 = arith.constant 0 : index
    %c0_25 = arith.constant 0 : index
    %64 = vector.load %arg8[%c0_24, %c0_25] : memref<1x128xi32, #tpu.memory_space<vmem>>, vector<1x128xi32>
    %65 = vector.broadcast %63 : vector<128x1xi32> to vector<128x128xi32>
    %66 = vector.broadcast %64 : vector<1x128xi32> to vector<128x128xi32>
    %67 = arith.cmpi eq, %65, %66 : vector<128x128xi32>
    %cst_26 = arith.constant -1.000000e+30 : f32
    %68 = vector.broadcast %cst_26 : f32 to vector<128x128xf32>
    %69 = arith.select %67, %62, %68 : vector<128x128xi1>, vector<128x128xf32>
    %cst_27 = arith.constant dense<0xFF800000> : vector<128xf32>
    %70 = vector.multi_reduction <maximumf>, %69, %cst_27 [1] : vector<128x128xf32> to vector<128xf32>
    %71 = vector.shape_cast %70 : vector<128xf32> to vector<128x1xf32>
    %72 = vector.broadcast %71 : vector<128x1xf32> to vector<128x128xf32>
    %73 = arith.subf %69, %72 : vector<128x128xf32>
    %74 = math.exp %73 : vector<128x128xf32>
    %cst_28 = arith.constant dense<0.000000e+00> : vector<128xf32>
    %75 = vector.multi_reduction <add>, %74, %cst_28 [1] : vector<128x128xf32> to vector<128xf32>
    %76 = vector.shape_cast %75 : vector<128xf32> to vector<128x1xf32>
    %77 = tpu.reciprocal %76 : vector<128x1xf32> -> vector<128x1xf32>
    %78 = vector.broadcast %77 : vector<128x1xf32> to vector<128x128xf32>
    %79 = arith.mulf %74, %78 : vector<128x128xf32>
    %cst_29 = arith.constant dense<0.000000e+00> : vector<4x128xf32>
    %80 = tpu.matmul %61, %79, %cst_29 {dimension_numbers = #tpu.dot_dimension_numbers<[1], [1], [0], [0], [0, 0, 1, 0], [], []>} : vector<4x128xf32>, vector<128x128xf32>, vector<4x128xf32> -> vector<4x128xf32>
    %cst_30 = arith.constant dense<0xFF800000> : vector<128xf32>
    %81 = vector.multi_reduction <maximumf>, %69, %cst_30 [0] : vector<128x128xf32> to vector<128xf32>
    %82 = vector.shape_cast %81 : vector<128xf32> to vector<1x128xf32>
    %83 = vector.broadcast %82 : vector<1x128xf32> to vector<128x128xf32>
    %84 = arith.subf %69, %83 : vector<128x128xf32>
    %85 = math.exp %84 : vector<128x128xf32>
    %cst_31 = arith.constant dense<0.000000e+00> : vector<128xf32>
    %86 = vector.multi_reduction <add>, %85, %cst_31 [0] : vector<128x128xf32> to vector<128xf32>
    %87 = vector.shape_cast %86 : vector<128xf32> to vector<1x128xf32>
    %88 = tpu.reciprocal %87 : vector<1x128xf32> -> vector<1x128xf32>
    %89 = vector.broadcast %88 : vector<1x128xf32> to vector<128x128xf32>
    %90 = arith.mulf %85, %89 : vector<128x128xf32>
    %cst_32 = arith.constant dense<0.000000e+00> : vector<4x128xf32>
    %91 = tpu.matmul %60, %90, %cst_32 {dimension_numbers = #tpu.dot_dimension_numbers<[1], [0], [0], [1], [0, 0, 1, 1], [], []>} : vector<4x128xf32>, vector<128x128xf32>, vector<4x128xf32> -> vector<4x128xf32>
    %92 = vector.extract_strided_slice %7 {offsets = [0, 0], sizes = [4, 1], strides = [1, 1]} : vector<8x1xf32> to vector<4x1xf32>
    %93 = vector.broadcast %92 : vector<4x1xf32> to vector<4x128xf32>
    %94 = arith.mulf %93, %80 : vector<4x128xf32>
    %95 = arith.addf %1, %94 : vector<4x128xf32>
    %96 = vector.extract_strided_slice %7 {offsets = [4, 0], sizes = [4, 1], strides = [1, 1]} : vector<8x1xf32> to vector<4x1xf32>
    %97 = vector.broadcast %96 : vector<4x1xf32> to vector<4x128xf32>
    %98 = arith.mulf %97, %91 : vector<4x128xf32>
    %99 = arith.addf %3, %98 : vector<4x128xf32>
    %100 = tpu.concatenate %95, %99 in 0 : vector<4x128xf32>, vector<4x128xf32> -> vector<8x128xf32>
    %c0_33 = arith.constant 0 : index
    %c0_34 = arith.constant 0 : index
    %c0_35 = arith.constant 0 : index
    %101 = vector.load %arg9[%c0_33, %c0_34, %c0_35] : memref<1x8x128xf32, #tpu.memory_space<vmem>>, vector<1x8x128xf32>
    %102 = vector.shape_cast %101 : vector<1x8x128xf32> to vector<8x128xf32>
    %103 = vector.shape_cast %100 : vector<8x128xf32> to vector<1x8x128xf32>
    tpu.vector_store %arg9[%c0_33, %c0_34, %c0_35], %103 {strides = array<i32>} : memref<1x8x128xf32, #tpu.memory_space<vmem>>, vector<1x8x128xf32>,
    return
  }
  func.func @transform_0(%arg0: i32, %arg1: i32) -> (i32, i32, i32) {
    %c0_i32 = arith.constant 0 : i32
    %c0_i32_0 = arith.constant 0 : i32
    return %arg0, %c0_i32, %arg1 : i32, i32, i32
  }
  func.func @transform_1(%arg0: i32, %arg1: i32) -> (i32, i32, i32) {
    %c0_i32 = arith.constant 0 : i32
    %c0_i32_0 = arith.constant 0 : i32
    return %arg0, %c0_i32, %arg1 : i32, i32, i32
  }
  func.func @transform_2(%arg0: i32, %arg1: i32) -> (i32, i32) {
    %c0_i32 = arith.constant 0 : i32
    %c0_i32_0 = arith.constant 0 : i32
    %c0_i32_1 = arith.constant 0 : i32
    return %c0_i32, %c0_i32_0 : i32, i32
  }
  func.func @transform_3(%arg0: i32, %arg1: i32) -> (i32, i32) {
    %c0_i32 = arith.constant 0 : i32
    %c0_i32_0 = arith.constant 0 : i32
    %c0_i32_1 = arith.constant 0 : i32
    return %c0_i32, %c0_i32_0 : i32, i32
  }
  func.func @transform_4(%arg0: i32, %arg1: i32) -> (i32, i32) {
    %c0_i32 = arith.constant 0 : i32
    %c0_i32_0 = arith.constant 0 : i32
    %c0_i32_1 = arith.constant 0 : i32
    return %c0_i32, %c0_i32_0 : i32, i32
  }
  func.func @transform_5(%arg0: i32, %arg1: i32) -> (i32, i32) {
    %c0_i32 = arith.constant 0 : i32
    %c0_i32_0 = arith.constant 0 : i32
    %c0_i32_1 = arith.constant 0 : i32
    return %c0_i32, %c0_i32_0 : i32, i32
  }
  func.func @transform_6(%arg0: i32, %arg1: i32) -> (i32, i32) {
    %c0_i32 = arith.constant 0 : i32
    %c0_i32_0 = arith.constant 0 : i32
    %c0_i32_1 = arith.constant 0 : i32
    return %c0_i32, %c0_i32_0 : i32, i32
  }
  func.func @transform_7(%arg0: i32, %arg1: i32) -> (i32, i32, i32) {
    %c0_i32 = arith.constant 0 : i32
    %c0_i32_0 = arith.constant 0 : i32
    return %arg0, %c0_i32, %arg1 : i32, i32, i32
  }
}

</mosaic_0001>

<llo_original>
// kernel: tpu_custom_call.1
$region0: #{tpu_custom_call.1}
  #allocation0 [shape = 'u32[]', space=smem, size = 0x4, offset = 0x4, fixed_abs, tag = 'smem constant byte address 0x4 - core index']
  #allocation1 [shape = 'u32[144,128]{1,0:T(1,128)}', space=vmem, size = 0x12000, scoped, tag = 'internal scratch']
  %s0 = inlined_call_operand.vmem [shape: f32[2,4,256], index: 0, kind: input, shape index: {}]
  %s1 = inlined_call_operand.vmem [shape: f32[2,4,256], index: 1, kind: input, shape index: {}]
  %s2 = inlined_call_operand.vmem [shape: f32[16,16], index: 2, kind: input, shape index: {}]
  %s3 = inlined_call_operand.vmem [shape: f32[16,1], index: 3, kind: input, shape index: {}]
  %s4 = inlined_call_operand.vmem [shape: f32[8,3], index: 4, kind: input, shape index: {}]
  %s5 = inlined_call_operand.vmem [shape: s32[128,1], index: 5, kind: input, shape index: {}]
  %s6 = inlined_call_operand.vmem [shape: s32[1,128], index: 6, kind: input, shape index: {}]
  %s7 = inlined_call_operand.hbm [shape: f32[2,8,256], index: 7, kind: output, shape index: {}]
  %s8 = sld [smem:[#allocation0]]
  $region61: #{tpu_custom_call.1} parent=0
    _
  %s10 = ssub.s32 1, %s8
  %s11 = scalar_select 0, %s10, %s8
  $region1: #{tpu_custom_call.1} parent=0
    #allocation2 [shape = 'u8[8192]{0}', space=vmem, size = 0x2000, scoped, tag = 'output window, operand 0']
    #allocation3 [shape = 's32[2]{0}', space=sflag, size = 0x8, scoped, tag = 'scoped memory for tpu_custom_call.1']
    %12 = vsyncpa [#allocation3], 0
    %s13 = scalar_lea.sflag [#allocation3], 1
    %14 = vsyncpa %s13, 0
    loop: start=0, step=1, limit=6
    $region2: #{tpu_custom_call.1} parent=1 // loop_pre_header
      _
    $region3: #{tpu_custom_call.1} parent=1 // loop_header
      %s16 = sphi 0, %s20
      %p17 = scmp.ge.s32.totalorder %s16, 6
      %s23 = sphi 0, %s35
      %s24 = sphi 0, %s31
      %s25 = sphi 0, %s23
      %s26 = sphi 0, %s24
      %s27 = sphi 0, %s25
      %s28 = sphi 0, %s26
      %s40 = sphi 0, %s42
      %s43 = sphi 0, %s40
      %s44 = sphi 0, %s43
      %s60 = sphi 0, %s44
      %s68 = sphi 0, %s70
      %s71 = sphi 0, %s68
      %s72 = sphi 0, %s71
      %s88 = sphi 0, %s72
      %s92 = sphi 0, %s92
      %s94 = sphi 0, %s92
      %s95 = sphi 0, %s94
      %s109 = sphi 0, %s95
      %s113 = sphi 0, %s113
      %s115 = sphi 0, %s113
      %s116 = sphi 0, %s115
      %s130 = sphi 0, %s116
      %s134 = sphi 0, %s134
      %s136 = sphi 0, %s134
      %s137 = sphi 0, %s136
      %s151 = sphi 0, %s137
      %s155 = sphi 0, %s155
      %s157 = sphi 0, %s155
      %s158 = sphi 0, %s157
      %s172 = sphi 0, %s158
      %s176 = sphi 0, %s176
      %s178 = sphi 0, %s176
      %s179 = sphi 0, %s178
      %s193 = sphi 0, %s179
      %s201 = sphi 0, %s203
      %s204 = sphi 0, %s201
      %s205 = sphi 0, %s204
      %s221 = sphi 0, %s205
    $region4: #{tpu_custom_call.1} parent=1 // loop_header_branch
      %19 = sbr.rel (%p17) target = $region8
    $region5: #{tpu_custom_call.1} parent=1 // loop_body
      %s21 = ssub.s32 %s16, 1
      %s22 = ssub.s32 %s16, 2
      %s29 = sadd.s32 1, %s24
      %p30 = scmp.ge.s32.totalorder %s29, 2
      %s31 = scalar_select %p30, 0, %s29
      %s32 = sadd.s32 1, %s23
      %s33 = scalar_select %p30, %s32, %s23
      %p34 = scmp.ge.s32.totalorder %s33, 2
      %s35 = scalar_select %p34, 0, %s33
      %s36 = ssub.s32 %s23, %s35
      %s37 = ssub.s32 %s24, %s31
      %s38 = sor.u32 %s36, %s37
      %p39 = scmp.eq.s32.totalorder %s38, 0
      %s41 = sadd.s32 %s40, 1
      %s42 = scalar_select %p39, %s40, %s41
      %p45 = pneg %p39
      %p46 = scmp.eq.s32.totalorder %s16, 3
      %p47 = por %p45, %p46
      %p48 = scmp.ne.s32.totalorder %s40, %s43
      %p49 = scmp.eq.s32.totalorder %s16, 0
      %p50 = por %p48, %p49
      %p51 = scmp.ne.s32.totalorder %s40, %s43
      %p52 = scmp.eq.s32.totalorder %s21, 3
      %p53 = por %p51, %p52
      %p54 = scmp.ne.s32.totalorder %s43, %s44
      %p55 = scmp.eq.s32.totalorder %s21, 0
      %p56 = por %p54, %p55
      %p57 = scmp.ne.s32.totalorder %s43, %s44
      %p58 = scmp.eq.s32.totalorder %s22, 3
      %p59 = por %p57, %p58
      %p61 = scmp.ne.s32.totalorder %s44, %s60
      %p62 = scmp.eq.s32.totalorder %s22, 0
      %p63 = por %p61, %p62
      %s64 = ssub.s32 %s23, %s35
      %s65 = ssub.s32 %s24, %s31
      %s66 = sor.u32 %s64, %s65
      %p67 = scmp.eq.s32.totalorder %s66, 0
      %s69 = sadd.s32 %s68, 1
      %s70 = scalar_select %p67, %s68, %s69
      %p73 = pneg %p67
      %p74 = scmp.eq.s32.totalorder %s16, 3
      %p75 = por %p73, %p74
      %p76 = scmp.ne.s32.totalorder %s68, %s71
      %p77 = scmp.eq.s32.totalorder %s16, 0
      %p78 = por %p76, %p77
      %p79 = scmp.ne.s32.totalorder %s68, %s71
      %p80 = scmp.eq.s32.totalorder %s21, 3
      %p81 = por %p79, %p80
      %p82 = scmp.ne.s32.totalorder %s71, %s72
      %p83 = scmp.eq.s32.totalorder %s21, 0
      %p84 = por %p82, %p83
      %p85 = scmp.ne.s32.totalorder %s71, %s72
      %p86 = scmp.eq.s32.totalorder %s22, 3
      %p87 = por %p85, %p86
      %p89 = scmp.ne.s32.totalorder %s72, %s88
      %p90 = scmp.eq.s32.totalorder %s22, 0
      %p91 = por %p89, %p90
      %s93 = sadd.s32 %s92, 1
      %p96 = scmp.eq.s32.totalorder %s16, 3
      %p97 = scmp.ne.s32.totalorder %s92, %s94
      %p98 = scmp.eq.s32.totalorder %s16, 0
      %p99 = por %p97, %p98
      %p100 = scmp.ne.s32.totalorder %s92, %s94
      %p101 = scmp.eq.s32.totalorder %s21, 3
      %p102 = por %p100, %p101
      %p103 = scmp.ne.s32.totalorder %s94, %s95
      %p104 = scmp.eq.s32.totalorder %s21, 0
      %p105 = por %p103, %p104
      %p106 = scmp.ne.s32.totalorder %s94, %s95
      %p107 = scmp.eq.s32.totalorder %s22, 3
      %p108 = por %p106, %p107
      %p110 = scmp.ne.s32.totalorder %s95, %s109
      %p111 = scmp.eq.s32.totalorder %s22, 0
      %p112 = por %p110, %p111
      %s114 = sadd.s32 %s113, 1
      %p117 = scmp.eq.s32.totalorder %s16, 3
      %p118 = scmp.ne.s32.totalorder %s113, %s115
      %p119 = scmp.eq.s32.totalorder %s16, 0
      %p120 = por %p118, %p119
      %p121 = scmp.ne.s32.totalorder %s113, %s115
      %p122 = scmp.eq.s32.totalorder %s21, 3
      %p123 = por %p121, %p122
      %p124 = scmp.ne.s32.totalorder %s115, %s116
      %p125 = scmp.eq.s32.totalorder %s21, 0
      %p126 = por %p124, %p125
      %p127 = scmp.ne.s32.totalorder %s115, %s116
      %p128 = scmp.eq.s32.totalorder %s22, 3
      %p129 = por %p127, %p128
      %p131 = scmp.ne.s32.totalorder %s116, %s130
      %p132 = scmp.eq.s32.totalorder %s22, 0
      %p133 = por %p131, %p132
      %s135 = sadd.s32 %s134, 1
      %p138 = scmp.eq.s32.totalorder %s16, 3
      %p139 = scmp.ne.s32.totalorder %s134, %s136
      %p140 = scmp.eq.s32.totalorder %s16, 0
      %p141 = por %p139, %p140
      %p142 = scmp.ne.s32.totalorder %s134, %s136
      %p143 = scmp.eq.s32.totalorder %s21, 3
      %p144 = por %p142, %p143
      %p145 = scmp.ne.s32.totalorder %s136, %s137
      %p146 = scmp.eq.s32.totalorder %s21, 0
      %p147 = por %p145, %p146
      %p148 = scmp.ne.s32.totalorder %s136, %s137
      %p149 = scmp.eq.s32.totalorder %s22, 3
      %p150 = por %p148, %p149
      %p152 = scmp.ne.s32.totalorder %s137, %s151
      %p153 = scmp.eq.s32.totalorder %s22, 0
      %p154 = por %p152, %p153
      %s156 = sadd.s32 %s155, 1
      %p159 = scmp.eq.s32.totalorder %s16, 3
      %p160 = scmp.ne.s32.totalorder %s155, %s157
      %p161 = scmp.eq.s32.totalorder %s16, 0
      %p162 = por %p160, %p161
      %p163 = scmp.ne.s32.totalorder %s155, %s157
      %p164 = scmp.eq.s32.totalorder %s21, 3
      %p165 = por %p163, %p164
      %p166 = scmp.ne.s32.totalorder %s157, %s158
      %p167 = scmp.eq.s32.totalorder %s21, 0
      %p168 = por %p166, %p167
      %p169 = scmp.ne.s32.totalorder %s157, %s158
      %p170 = scmp.eq.s32.totalorder %s22, 3
      %p171 = por %p169, %p170
      %p173 = scmp.ne.s32.totalorder %s158, %s172
      %p174 = scmp.eq.s32.totalorder %s22, 0
      %p175 = por %p173, %p174
      %s177 = sadd.s32 %s176, 1
      %p180 = scmp.eq.s32.totalorder %s16, 3
      %p181 = scmp.ne.s32.totalorder %s176, %s178
      %p182 = scmp.eq.s32.totalorder %s16, 0
      %p183 = por %p181, %p182
      %p184 = scmp.ne.s32.totalorder %s176, %s178
      %p185 = scmp.eq.s32.totalorder %s21, 3
      %p186 = por %p184, %p185
      %p187 = scmp.ne.s32.totalorder %s178, %s179
      %p188 = scmp.eq.s32.totalorder %s21, 0
      %p189 = por %p187, %p188
      %p190 = scmp.ne.s32.totalorder %s178, %s179
      %p191 = scmp.eq.s32.totalorder %s22, 3
      %p192 = por %p190, %p191
      %p194 = scmp.ne.s32.totalorder %s179, %s193
      %p195 = scmp.eq.s32.totalorder %s22, 0
      %p196 = por %p194, %p195
      %s197 = ssub.s32 %s23, %s35
      %s198 = ssub.s32 %s24, %s31
      %s199 = sor.u32 %s197, %s198
      %p200 = scmp.eq.s32.totalorder %s199, 0
      %s202 = sadd.s32 %s201, 1
      %s203 = scalar_select %p200, %s201, %s202
      %p206 = pneg %p200
      %p207 = scmp.eq.s32.totalorder %s16, 3
      %p208 = por %p206, %p207
      %p209 = scmp.ne.s32.totalorder %s201, %s204
      %p210 = scmp.eq.s32.totalorder %s16, 0
      %p211 = por %p209, %p210
      %p212 = scmp.ne.s32.totalorder %s201, %s204
      %p213 = scmp.eq.s32.totalorder %s21, 3
      %p214 = por %p212, %p213
      %p215 = scmp.ne.s32.totalorder %s204, %s205
      %p216 = scmp.eq.s32.totalorder %s21, 0
      %p217 = por %p215, %p216
      %p218 = scmp.ne.s32.totalorder %s204, %s205
      %p219 = scmp.eq.s32.totalorder %s22, 3
      %p220 = por %p218, %p219
      %p222 = scmp.ne.s32.totalorder %s205, %s221
      %p223 = scmp.eq.s32.totalorder %s22, 0
      %p224 = por %p222, %p223
      %p225 = scmp.le.s32.totalorder 1, %s16
      %p226 = scmp.lt.s32.totalorder %s16, 5
      %p227 = pnand %p225, %p226
      %p228 = pneg %p227
      // Predicated region
      $region9: #{tpu_custom_call.1} parent=5 // pred_check
        _
      $region10: #{tpu_custom_call.1} parent=5 // pred_check_branch
        %230 = sbr.rel (%p227) target = $region12
      $region11: #{tpu_custom_call.1} parent=5 // pred_region
        %s231 = ssub.s32 %s16, 1
        // Predicated region
        $region13: #{tpu_custom_call.1} parent=11 // pred_check
          %p232 = pneg %p105
        $region14: #{tpu_custom_call.1} parent=11 // pred_check_branch
          %234 = sbr.rel (%p232) target = $region16
        $region15: #{tpu_custom_call.1} parent=11 // pred_region
          _
        $region16: #{tpu_custom_call.1} parent=11 // pred_fallthru
          _
        // Predicated region
        $region17: #{tpu_custom_call.1} parent=11 // pred_check
          %p235 = pneg %p126
        $region18: #{tpu_custom_call.1} parent=11 // pred_check_branch
          %237 = sbr.rel (%p235) target = $region20
        $region19: #{tpu_custom_call.1} parent=11 // pred_region
          _
        $region20: #{tpu_custom_call.1} parent=11 // pred_fallthru
          _
        // Predicated region
        $region21: #{tpu_custom_call.1} parent=11 // pred_check
          %p238 = pneg %p147
        $region22: #{tpu_custom_call.1} parent=11 // pred_check_branch
          %240 = sbr.rel (%p238) target = $region24
        $region23: #{tpu_custom_call.1} parent=11 // pred_region
          _
        $region24: #{tpu_custom_call.1} parent=11 // pred_fallthru
          _
        // Predicated region
        $region25: #{tpu_custom_call.1} parent=11 // pred_check
          %p241 = pneg %p168
        $region26: #{tpu_custom_call.1} parent=11 // pred_check_branch
          %243 = sbr.rel (%p241) target = $region28
        $region27: #{tpu_custom_call.1} parent=11 // pred_region
          _
        $region28: #{tpu_custom_call.1} parent=11 // pred_fallthru
          _
        // Predicated region
        $region29: #{tpu_custom_call.1} parent=11 // pred_check
          %p244 = pneg %p189
        $region30: #{tpu_custom_call.1} parent=11 // pred_check_branch
          %246 = sbr.rel (%p244) target = $region32
        $region31: #{tpu_custom_call.1} parent=11 // pred_region
          _
        $region32: #{tpu_custom_call.1} parent=11 // pred_fallthru
          _
      $region12: #{tpu_custom_call.1} parent=5 // pred_fallthru
        _
      %p247 = scmp.lt.s32.totalorder %s16, 4
      // Predicated region
      $region33: #{tpu_custom_call.1} parent=5 // pred_check
        %p248 = pneg %p247
      $region34: #{tpu_custom_call.1} parent=5 // pred_check_branch
        %250 = sbr.rel (%p248) target = $region36
      $region35: #{tpu_custom_call.1} parent=5 // pred_region
        // Predicated region
        $region37: #{tpu_custom_call.1} parent=35 // pred_check
          %p251 = pneg %p50
        $region38: #{tpu_custom_call.1} parent=35 // pred_check_branch
          %253 = sbr.rel (%p251) target = $region40
        $region39: #{tpu_custom_call.1} parent=35 // pred_region
          %p254 = scmp.lt.s32.totalorder %s23, 1
          %s255 = scalar_select %p254, %s23, 1
          %p256 = scmp.lt.s32.totalorder %s24, 1
          %s257 = scalar_select %p256, %s24, 1
          %s258 = smul.addr %s255, 2
          %s259 = sadd.s32 %s257, %s258
          %s260 = smul.addr %s259, 4
          %s261 = scalar_lea.vmem %s0, %s260
        $region40: #{tpu_custom_call.1} parent=35 // pred_fallthru
          _
        // Predicated region
        $region41: #{tpu_custom_call.1} parent=35 // pred_check
          %p262 = pneg %p78
        $region42: #{tpu_custom_call.1} parent=35 // pred_check_branch
          %264 = sbr.rel (%p262) target = $region44
        $region43: #{tpu_custom_call.1} parent=35 // pred_region
          %p265 = scmp.lt.s32.totalorder %s23, 1
          %s266 = scalar_select %p265, %s23, 1
          %p267 = scmp.lt.s32.totalorder %s24, 1
          %s268 = scalar_select %p267, %s24, 1
          %s269 = smul.addr %s266, 2
          %s270 = sadd.s32 %s268, %s269
          %s271 = smul.addr %s270, 4
          %s272 = scalar_lea.vmem %s1, %s271
        $region44: #{tpu_custom_call.1} parent=35 // pred_fallthru
          _
      $region36: #{tpu_custom_call.1} parent=5 // pred_fallthru
        _
      %p273 = scmp.le.s32.totalorder 1, %s16
      %p274 = scmp.lt.s32.totalorder %s16, 5
      %p275 = pnand %p273, %p274
      %p276 = pneg %p275
      // Predicated region
      $region45: #{tpu_custom_call.1} parent=5 // pred_check
        _
      $region46: #{tpu_custom_call.1} parent=5 // pred_check_branch
        %278 = sbr.rel (%p275) target = $region48
      $region47: #{tpu_custom_call.1} parent=5 // pred_region
        %s279 = ssub.s32 %s16, 1
        %p280 = scmp.lt.s32.totalorder %s25, 1
        %s281 = scalar_select %p280, %s25, 1
        %p282 = scmp.lt.s32.totalorder %s26, 1
        %s283 = scalar_select %p282, %s26, 1
        %s284 = smul.addr %s281, 2
        %s285 = sadd.s32 %s283, %s284
        %s286 = smul.addr %s285, 4
        %s287 = scalar_lea.vmem %s0, %s286
        %p288 = pneg %p56
        %p289 = pneg %p53
        %p290 = scmp.lt.s32.totalorder %s25, 1
        %s291 = scalar_select %p290, %s25, 1
        %p292 = scmp.lt.s32.totalorder %s26, 1
        %s293 = scalar_select %p292, %s26, 1
        %s294 = smul.addr %s291, 2
        %s295 = sadd.s32 %s293, %s294
        %s296 = smul.addr %s295, 4
        %s297 = scalar_lea.vmem %s1, %s296
        %p298 = pneg %p84
        %p299 = pneg %p81
        %p300 = pneg %p105
        %p301 = pneg %p102
        %p302 = pneg %p126
        %p303 = pneg %p123
        %p304 = pneg %p147
        %p305 = pneg %p144
        %p306 = pneg %p168
        %p307 = pneg %p165
        %p308 = pneg %p189
        %p309 = pneg %p186
        %p310 = pneg %p217
        %p311 = pneg %p214
        %s312 = sand.u32 %s204, 1
        %s313 = scalar_lea.sflag [#allocation3], %s312
        %s314 = sand.u32 %s204, 1
        %s315 = smul.addr %s314, 8
        %s316 = scalar_lea.vmem [#allocation2], %s315
        %p317 = scmp.lt.s32.totalorder %s25, 1
        %s318 = scalar_select %p317, %s25, 1
        %p319 = scmp.lt.s32.totalorder %s26, 1
        %s320 = scalar_select %p319, %s26, 1
        %s321 = smul.addr %s318, 2
        %s322 = sadd.s32 %s320, %s321
        %s323 = smul.addr %s322, 4
        %s324 = scalar_lea.vmem %s0, %s323
        %p325 = scmp.lt.s32.totalorder %s25, 1
        %s326 = scalar_select %p325, %s25, 1
        %p327 = scmp.lt.s32.totalorder %s26, 1
        %s328 = scalar_select %p327, %s26, 1
        %s329 = smul.addr %s326, 2
        %s330 = sadd.s32 %s328, %s329
        %s331 = smul.addr %s330, 4
        %s332 = scalar_lea.vmem %s1, %s331
        %v333 = vld [vmem:[%s324] sm:$0xf]
        %v334 = vld [vmem:[%s332] sm:$0xf]
        %v335 = vld [vmem:[%s4] sm:$0xff]
        %vm336 = vcmask 1043456
        %v337 = vsel %vm336, %v333, 0.0
        %v338 = vrot.slane %v337, 4
        %v339 = vadd.f32 %v337, %v338
        %v340 = vrot.slane %v339, 2
        %v341 = vadd.f32 %v339, %v340
        %v342 = vrot.slane %v341, 1
        %v343 = vadd.f32 %v341, %v342
        %v344 = vmul.f32 %v343, 0.25
        %v345 = vsub.f32 %v333, %v344
        %v346 = vmul.f32 %v345, %v345
        %v347 = vsel %vm336, %v346, 0.0
        %v348 = vrot.slane %v347, 4
        %v349 = vadd.f32 %v347, %v348
        %v350 = vrot.slane %v349, 2
        %v351 = vadd.f32 %v349, %v350
        %v352 = vrot.slane %v351, 1
        %v353 = vadd.f32 %v351, %v352
        %v354 = vmul.f32 %v353, 0.25
        %v355 = vadd.f32 %v354, 1e-06
        %v356 = vrsqrt.pop %v355
        %v357 = vmul.f32 %v345, %v356
        %359 = vset.pattern.permute.xlu0 0
        %360 = vperm.xlu0 %359, %v335
        %v361 = vpop.permute.xlu0 %360
        %v363 = vmul.f32 %v357, %v361
        %364 = vset.pattern.permute.xlu0 1
        %365 = vperm.xlu0 %364, %v335
        %v366 = vpop.permute.xlu0 %365
        %v368 = vadd.f32 %v363, %v366
        %v369 = vsel %vm336, %v334, 0.0
        %v370 = vrot.slane %v369, 4
        %v371 = vadd.f32 %v369, %v370
        %v372 = vrot.slane %v371, 2
        %v373 = vadd.f32 %v371, %v372
        %v374 = vrot.slane %v373, 1
        %v375 = vadd.f32 %v373, %v374
        %v376 = vmul.f32 %v375, 0.25
        %v377 = vsub.f32 %v334, %v376
        %v378 = vmul.f32 %v377, %v377
        %v379 = vsel %vm336, %v378, 0.0
        %v380 = vrot.slane %v379, 4
        %v381 = vadd.f32 %v379, %v380
        %v382 = vrot.slane %v381, 2
        %v383 = vadd.f32 %v381, %v382
        %v384 = vrot.slane %v383, 1
        %v385 = vadd.f32 %v383, %v384
        %v386 = vmul.f32 %v385, 0.25
        %v387 = vadd.f32 %v386, 1e-06
        %v388 = vrsqrt.pop %v387
        %v389 = vmul.f32 %v377, %v388
        %v390 = vrot.slane %v361, 4
        %v392 = vmul.f32 %v389, %v390
        %v393 = vrot.slane %v366, 4
        %v395 = vadd.f32 %v392, %v393
        %v397 = vrot.slane %v395, 4
        %v400 = vrot.slane %v334, 4
        %v402 = vsel %vm336, %v368, %v397
        %v403 = vsel %vm336, %v333, %v400
        %v404 = vld [vmem:[%s2] sm:$0xff]
        %v405 = vld [vmem:[%s2 + $0x8] sm:$0xff]
        %v406 = vld [vmem:[%s3] sm:$0xff]
        %v407 = vld [vmem:[%s3 + $0x8] sm:$0xff]
        %409 = vset.pattern.permute.xlu0 0
        %410 = vperm.xlu0 %409, %v406
        %v411 = vpop.permute.xlu0 %410
        %414 = vset.pattern.permute.xlu0 0
        %415 = vperm.xlu0 %414, %v407
        %v416 = vpop.permute.xlu0 %415
        %vm418 = vcmask 130048
        %v420 = vsel %vm418, %v404, 0
        %v423 = vsel %vm418, %v405, 0
        %425 = vmatprep.subr.mxu0 0.0
        %426 = vmatpush1.msra.mxu0 %v402
        %427 = vmatprep.subr.mxu0 0.0
        %428 = vmatpush1.msra.mxu0 %v403
        %429 = vmatprep.subr.mxu0 0.0
        %430 = vmatpush1.msra.mxu0 0.0
        %431 = vmatprep.subr.mxu0 0.0
        %432 = vmatpush1.msra.mxu0 0.0
        %433 = vmatprep.subr.mxu0 0.0
        %434 = vmatpush1.msra.mxu0 0.0
        %435 = vmatprep.subr.mxu0 0.0
        %436 = vmatpush1.msra.mxu0 0.0
        %437 = vmatprep.subr.mxu0 0.0
        %438 = vmatpush1.msra.mxu0 0.0
        %439 = vmatprep.subr.mxu0 0.0
        %440 = vmatpush1.msra.mxu0 0.0
        %441 = vmatprep.subr.mxu0 0.0
        %442 = vmatpush1.msra.mxu0 0.0
        %443 = vmatprep.subr.mxu0 0.0
        %444 = vmatpush1.msra.mxu0 0.0
        %445 = vmatprep.subr.mxu0 0.0
        %446 = vmatpush1.msra.mxu0 0.0
        %447 = vmatprep.subr.mxu0 0.0
        %448 = vmatpush1.msra.mxu0 0.0
        %449 = vmatprep.subr.mxu0 0.0
        %450 = vmatpush1.msra.mxu0 0.0
        %451 = vmatprep.subr.mxu0 0.0
        %452 = vmatpush1.msra.mxu0 0.0
        %453 = vmatprep.subr.mxu0 0.0
        %454 = vmatpush1.msra.mxu0 0.0
        %455 = vmatprep.subr.mxu0 0.0
        %456 = vmatpush1.msra.mxu0 0.0
        %457 = vmatprep.subr.mxu0 0.0
        %458 = vmatpush1.msra.mxu0 0.0
        %459 = vmatprep.subr.mxu0 0.0
        %460 = vmatpush1.msra.mxu0 0.0
        %461 = vmatprep.subr.mxu0 0.0
        %462 = vmatpush1.msra.mxu0 0.0
        %463 = vmatprep.subr.mxu0 0.0
        %464 = vmatpush1.msra.mxu0 0.0
        %465 = vmatprep.subr.mxu0 0.0
        %466 = vmatpush1.msra.mxu0 0.0
        %467 = vmatprep.subr.mxu0 0.0
        %468 = vmatpush1.msra.mxu0 0.0
        %469 = vmatprep.subr.mxu0 0.0
        %470 = vmatpush1.msra.mxu0 0.0
        %471 = vmatprep.subr.mxu0 0.0
        %472 = vmatpush1.msra.mxu0 0.0
        %473 = vmatprep.subr.mxu0 0.0
        %474 = vmatpush1.msra.mxu0 0.0
        %475 = vmatprep.subr.mxu0 0.0
        %476 = vmatpush1.msra.mxu0 0.0
        %477 = vmatprep.subr.mxu0 0.0
        %478 = vmatpush1.msra.mxu0 0.0
        %479 = vmatprep.subr.mxu0 0.0
        %480 = vmatpush1.msra.mxu0 0.0
        %481 = vmatprep.subr.mxu0 0.0
        %482 = vmatpush1.msra.mxu0 0.0
        %483 = vmatprep.subr.mxu0 0.0
        %484 = vmatpush1.msra.mxu0 0.0
        %485 = vmatprep.subr.mxu0 0.0
        %486 = vmatpush1.msra.mxu0 0.0
        %487 = vmatprep.subr.mxu0 0.0
        %488 = vmatpush1.msra.mxu0 0.0
        %489 = vmatprep.mubr.f32.mxu0 0.0
        %490 = vmatmul.mubr.f32.gmra.mrb[0].mxu0 %v420
        %v491 = vpop.f32.mrb[0].mxu0
        %v492 = vadd.f32 %v411, %v491
        %v493 = vpop.f32.mrb[0].mxu0
        %494 = vmatprep.mubr.f32.mxu0 0.0
        %495 = vmatmul.mubr.f32.gmra.mrb[0].mxu0 %v423
        %v496 = vpop.f32.mrb[0].mxu0
        %v497 = vadd.f32 %v416, %v496
        %v498 = vpop.f32.mrb[0].mxu0
        %499 = vdwg.mxu0
        %500 = vxpose.xlu0.b32.start [1/16] %v492, 128
        %501 = vxpose.xlu0.b32.cont [2/16] 0.0, 128
        %502 = vxpose.xlu0.b32.cont [3/16] 0.0, 128
        %503 = vxpose.xlu0.b32.cont [4/16] 0.0, 128
        %504 = vxpose.xlu0.b32.cont [5/16] 0.0, 128
        %505 = vxpose.xlu0.b32.cont [6/16] 0.0, 128
        %506 = vxpose.xlu0.b32.cont [7/16] 0.0, 128
        %507 = vxpose.xlu0.b32.cont [8/16] 0.0, 128
        %508 = vxpose.xlu0.b32.cont [9/16] 0.0, 128
        %509 = vxpose.xlu0.b32.cont [10/16] 0.0, 128
        %510 = vxpose.xlu0.b32.cont [11/16] 0.0, 128
        %511 = vxpose.xlu0.b32.cont [12/16] 0.0, 128
        %512 = vxpose.xlu0.b32.cont [13/16] 0.0, 128
        %513 = vxpose.xlu0.b32.cont [14/16] 0.0, 128
        %514 = vxpose.xlu0.b32.cont [15/16] 0.0, 128
        %515 = vxpose.xlu0.b32.end [16/16] 0.0, 128
        %v516 = vpop.trf.xlu0
        %v517 = vpop.trf.xlu0
        %v518 = vpop.trf.xlu0
        %v519 = vpop.trf.xlu0
        %v520 = vpop.trf.xlu0
        %v521 = vpop.trf.xlu0
        %v522 = vpop.trf.xlu0
        %v523 = vpop.trf.xlu0
        %v524 = vpop.trf.xlu0
        %v525 = vpop.trf.xlu0
        %v526 = vpop.trf.xlu0
        %v527 = vpop.trf.xlu0
        %v528 = vpop.trf.xlu0
        %v529 = vpop.trf.xlu0
        %v530 = vpop.trf.xlu0
        %v531 = vpop.trf.xlu0
        %v533 = vrot.slane %v492, 4
        %vm534 = vcmask 31744
        %v536 = vsel %vm534, %v516, 0
        %v539 = vsel %vm534, %v517, 0
        %v542 = vsel %vm534, %v518, 0
        %v545 = vsel %vm534, %v519, 0
        %v548 = vsel %vm534, %v520, 0
        %v551 = vsel %vm534, %v521, 0
        %v554 = vsel %vm534, %v522, 0
        %v557 = vsel %vm534, %v523, 0
        %v560 = vsel %vm534, %v524, 0
        %v563 = vsel %vm534, %v525, 0
        %v566 = vsel %vm534, %v526, 0
        %v569 = vsel %vm534, %v527, 0
        %v572 = vsel %vm534, %v528, 0
        %v575 = vsel %vm534, %v529, 0
        %v578 = vsel %vm534, %v530, 0
        %v581 = vsel %vm534, %v531, 0
        %v583 = vsel %vm336, %v533, 0
        %585 = vmatprep.subr.mxu0 0.0
        %586 = vmatpush1.msra.mxu0 %v583
        %587 = vmatprep.subr.mxu0 0.0
        %588 = vmatpush1.msra.mxu0 0.0
        %589 = vmatprep.subr.mxu0 0.0
        %590 = vmatpush1.msra.mxu0 0.0
        %591 = vmatprep.subr.mxu0 0.0
        %592 = vmatpush1.msra.mxu0 0.0
        %593 = vmatprep.subr.mxu0 0.0
        %594 = vmatpush1.msra.mxu0 0.0
        %595 = vmatprep.subr.mxu0 0.0
        %596 = vmatpush1.msra.mxu0 0.0
        %597 = vmatprep.subr.mxu0 0.0
        %598 = vmatpush1.msra.mxu0 0.0
        %599 = vmatprep.subr.mxu0 0.0
        %600 = vmatpush1.msra.mxu0 0.0
        %601 = vmatprep.subr.mxu0 0.0
        %602 = vmatpush1.msra.mxu0 0.0
        %603 = vmatprep.subr.mxu0 0.0
        %604 = vmatpush1.msra.mxu0 0.0
        %605 = vmatprep.subr.mxu0 0.0
        %606 = vmatpush1.msra.mxu0 0.0
        %607 = vmatprep.subr.mxu0 0.0
        %608 = vmatpush1.msra.mxu0 0.0
        %609 = vmatprep.subr.mxu0 0.0
        %610 = vmatpush1.msra.mxu0 0.0
        %611 = vmatprep.subr.mxu0 0.0
        %612 = vmatpush1.msra.mxu0 0.0
        %613 = vmatprep.subr.mxu0 0.0
        %614 = vmatpush1.msra.mxu0 0.0
        %615 = vmatprep.subr.mxu0 0.0
        %616 = vmatpush1.msra.mxu0 0.0
        %617 = vmatprep.subr.mxu0 0.0
        %618 = vmatpush1.msra.mxu0 0.0
        %619 = vmatprep.subr.mxu0 0.0
        %620 = vmatpush1.msra.mxu0 0.0
        %621 = vmatprep.subr.mxu0 0.0
        %622 = vmatpush1.msra.mxu0 0.0
        %623 = vmatprep.subr.mxu0 0.0
        %624 = vmatpush1.msra.mxu0 0.0
        %625 = vmatprep.subr.mxu0 0.0
        %626 = vmatpush1.msra.mxu0 0.0
        %627 = vmatprep.subr.mxu0 0.0
        %628 = vmatpush1.msra.mxu0 0.0
        %629 = vmatprep.subr.mxu0 0.0
        %630 = vmatpush1.msra.mxu0 0.0
        %631 = vmatprep.subr.mxu0 0.0
        %632 = vmatpush1.msra.mxu0 0.0
        %633 = vmatprep.subr.mxu0 0.0
        %634 = vmatpush1.msra.mxu0 0.0
        %635 = vmatprep.subr.mxu0 0.0
        %636 = vmatpush1.msra.mxu0 0.0
        %637 = vmatprep.subr.mxu0 0.0
        %638 = vmatpush1.msra.mxu0 0.0
        %639 = vmatprep.subr.mxu0 0.0
        %640 = vmatpush1.msra.mxu0 0.0
        %641 = vmatprep.subr.mxu0 0.0
        %642 = vmatpush1.msra.mxu0 0.0
        %643 = vmatprep.subr.mxu0 0.0
        %644 = vmatpush1.msra.mxu0 0.0
        %645 = vmatprep.subr.mxu0 0.0
        %646 = vmatpush1.msra.mxu0 0.0
        %647 = vmatprep.subr.mxu0 0.0
        %648 = vmatpush1.msra.mxu0 0.0
        %649 = vmatprep.mubr.f32.mxu0 0.0
        %650 = vmatmul.mubr.f32.gmra.mrb[0].mxu0 %v536
        %v651 = vpop.f32.mrb[0].mxu0
        %v652 = vadd.f32 0.0, %v651
        %v653 = vpop.f32.mrb[0].mxu0
        %654 = vmatprep.mubr.f32.mxu0 0.0
        %655 = vmatmul.mubr.f32.gmra.mrb[0].mxu0 %v539
        %v656 = vpop.f32.mrb[0].mxu0
        %v657 = vadd.f32 0.0, %v656
        %v658 = vpop.f32.mrb[0].mxu0
        %659 = vmatprep.mubr.f32.mxu0 0.0
        %660 = vmatmul.mubr.f32.gmra.mrb[0].mxu0 %v542
        %v661 = vpop.f32.mrb[0].mxu0
        %v662 = vadd.f32 0.0, %v661
        %v663 = vpop.f32.mrb[0].mxu0
        %664 = vmatprep.mubr.f32.mxu0 0.0
        %665 = vmatmul.mubr.f32.gmra.mrb[0].mxu0 %v545
        %v666 = vpop.f32.mrb[0].mxu0
        %v667 = vadd.f32 0.0, %v666
        %v668 = vpop.f32.mrb[0].mxu0
        %669 = vmatprep.mubr.f32.mxu0 0.0
        %670 = vmatmul.mubr.f32.gmra.mrb[0].mxu0 %v548
        %v671 = vpop.f32.mrb[0].mxu0
        %v672 = vadd.f32 0.0, %v671
        %v673 = vpop.f32.mrb[0].mxu0
        %674 = vmatprep.mubr.f32.mxu0 0.0
        %675 = vmatmul.mubr.f32.gmra.mrb[0].mxu0 %v551
        %v676 = vpop.f32.mrb[0].mxu0
        %v677 = vadd.f32 0.0, %v676
        %v678 = vpop.f32.mrb[0].mxu0
        %679 = vmatprep.mubr.f32.mxu0 0.0
        %680 = vmatmul.mubr.f32.gmra.mrb[0].mxu0 %v554
        %v681 = vpop.f32.mrb[0].mxu0
        %v682 = vadd.f32 0.0, %v681
        %v683 = vpop.f32.mrb[0].mxu0
        %684 = vmatprep.mubr.f32.mxu0 0.0
        %685 = vmatmul.mubr.f32.gmra.mrb[0].mxu0 %v557
        %v686 = vpop.f32.mrb[0].mxu0
        %v687 = vadd.f32 0.0, %v686
        %v688 = vpop.f32.mrb[0].mxu0
        %689 = vmatprep.mubr.f32.mxu0 0.0
        %690 = vmatmul.mubr.f32.gmra.mrb[0].mxu0 %v560
        %v691 = vpop.f32.mrb[0].mxu0
        %v692 = vadd.f32 0.0, %v691
        %v693 = vpop.f32.mrb[0].mxu0
        %694 = vmatprep.mubr.f32.mxu0 0.0
        %695 = vmatmul.mubr.f32.gmra.mrb[0].mxu0 %v563
        %v696 = vpop.f32.mrb[0].mxu0
        %v697 = vadd.f32 0.0, %v696
        %v698 = vpop.f32.mrb[0].mxu0
        %699 = vmatprep.mubr.f32.mxu0 0.0
        %700 = vmatmul.mubr.f32.gmra.mrb[0].mxu0 %v566
        %v701 = vpop.f32.mrb[0].mxu0
        %v702 = vadd.f32 0.0, %v701
        %v703 = vpop.f32.mrb[0].mxu0
        %704 = vmatprep.mubr.f32.mxu0 0.0
        %705 = vmatmul.mubr.f32.gmra.mrb[0].mxu0 %v569
        %v706 = vpop.f32.mrb[0].mxu0
        %v707 = vadd.f32 0.0, %v706
        %v708 = vpop.f32.mrb[0].mxu0
        %709 = vmatprep.mubr.f32.mxu0 0.0
        %710 = vmatmul.mubr.f32.gmra.mrb[0].mxu0 %v572
        %v711 = vpop.f32.mrb[0].mxu0
        %v712 = vadd.f32 0.0, %v711
        %v713 = vpop.f32.mrb[0].mxu0
        %714 = vmatprep.mubr.f32.mxu0 0.0
        %715 = vmatmul.mubr.f32.gmra.mrb[0].mxu0 %v575
        %v716 = vpop.f32.mrb[0].mxu0
        %v717 = vadd.f32 0.0, %v716
        %v718 = vpop.f32.mrb[0].mxu0
        %719 = vmatprep.mubr.f32.mxu0 0.0
        %720 = vmatmul.mubr.f32.gmra.mrb[0].mxu0 %v578
        %v721 = vpop.f32.mrb[0].mxu0
        %v722 = vadd.f32 0.0, %v721
        %v723 = vpop.f32.mrb[0].mxu0
        %724 = vmatprep.mubr.f32.mxu0 0.0
        %725 = vmatmul.mubr.f32.gmra.mrb[0].mxu0 %v581
        %v726 = vpop.f32.mrb[0].mxu0
        %v727 = vadd.f32 0.0, %v726
        %v728 = vpop.f32.mrb[0].mxu0
        %729 = vdwg.mxu0
        %v730 = vld [vmem:[%s5] sm:$0xff]
        %v731 = vld [vmem:[%s5 + $0x8] sm:$0xff]
        %v732 = vld [vmem:[%s5 + $0x10] sm:$0xff]
        %v733 = vld [vmem:[%s5 + $0x18] sm:$0xff]
        %v734 = vld [vmem:[%s5 + $0x20] sm:$0xff]
        %v735 = vld [vmem:[%s5 + $0x28] sm:$0xff]
        %v736 = vld [vmem:[%s5 + $0x30] sm:$0xff]
        %v737 = vld [vmem:[%s5 + $0x38] sm:$0xff]
        %v738 = vld [vmem:[%s5 + $0x40] sm:$0xff]
        %v739 = vld [vmem:[%s5 + $0x48] sm:$0xff]
        %v740 = vld [vmem:[%s5 + $0x50] sm:$0xff]
        %v741 = vld [vmem:[%s5 + $0x58] sm:$0xff]
        %v742 = vld [vmem:[%s5 + $0x60] sm:$0xff]
        %v743 = vld [vmem:[%s5 + $0x68] sm:$0xff]
        %v744 = vld [vmem:[%s5 + $0x70] sm:$0xff]
        %v745 = vld [vmem:[%s5 + $0x78] sm:$0xff]
        %v746 = vld [vmem:[%s6] sm:$0x1]
        %747 = vset.pattern.permute.xlu0 0
        %748 = vperm.xlu0 %747, %v730
        %v749 = vpop.permute.xlu0 %748
        %750 = vset.pattern.permute.xlu0 0
        %751 = vperm.xlu0 %750, %v731
        %v752 = vpop.permute.xlu0 %751
        %753 = vset.pattern.permute.xlu0 0
        %754 = vperm.xlu0 %753, %v732
        %v755 = vpop.permute.xlu0 %754
        %756 = vset.pattern.permute.xlu0 0
        %757 = vperm.xlu0 %756, %v733
        %v758 = vpop.permute.xlu0 %757
        %759 = vset.pattern.permute.xlu0 0
        %760 = vperm.xlu0 %759, %v734
        %v761 = vpop.permute.xlu0 %760
        %762 = vset.pattern.permute.xlu0 0
        %763 = vperm.xlu0 %762, %v735
        %v764 = vpop.permute.xlu0 %763
        %765 = vset.pattern.permute.xlu0 0
        %766 = vperm.xlu0 %765, %v736
        %v767 = vpop.permute.xlu0 %766
        %768 = vset.pattern.permute.xlu0 0
        %769 = vperm.xlu0 %768, %v737
        %v770 = vpop.permute.xlu0 %769
        %771 = vset.pattern.permute.xlu0 0
        %772 = vperm.xlu0 %771, %v738
        %v773 = vpop.permute.xlu0 %772
        %774 = vset.pattern.permute.xlu0 0
        %775 = vperm.xlu0 %774, %v739
        %v776 = vpop.permute.xlu0 %775
        %777 = vset.pattern.permute.xlu0 0
        %778 = vperm.xlu0 %777, %v740
        %v779 = vpop.permute.xlu0 %778
        %780 = vset.pattern.permute.xlu0 0
        %781 = vperm.xlu0 %780, %v741
        %v782 = vpop.permute.xlu0 %781
        %783 = vset.pattern.permute.xlu0 0
        %784 = vperm.xlu0 %783, %v742
        %v785 = vpop.permute.xlu0 %784
        %786 = vset.pattern.permute.xlu0 0
        %787 = vperm.xlu0 %786, %v743
        %v788 = vpop.permute.xlu0 %787
        %789 = vset.pattern.permute.xlu0 0
        %790 = vperm.xlu0 %789, %v744
        %v791 = vpop.permute.xlu0 %790
        %792 = vset.pattern.permute.xlu0 0
        %793 = vperm.xlu0 %792, %v745
        %v794 = vpop.permute.xlu0 %793
        %v795 = vlaneseq
        %v796 = vshrl.u32 %v795, 7
        %v797 = vsub.s32 0, %v796
        %v798 = vrot.slane %v746, %v797
        %vm799 = vcmp.eq.s32.totalorder %v749, %v798
        %vm800 = vcmp.eq.s32.totalorder %v752, %v798
        %vm801 = vcmp.eq.s32.totalorder %v755, %v798
        %vm802 = vcmp.eq.s32.totalorder %v758, %v798
        %vm803 = vcmp.eq.s32.totalorder %v761, %v798
        %vm804 = vcmp.eq.s32.totalorder %v764, %v798
        %vm805 = vcmp.eq.s32.totalorder %v767, %v798
        %vm806 = vcmp.eq.s32.totalorder %v770, %v798
        %vm807 = vcmp.eq.s32.totalorder %v773, %v798
        %vm808 = vcmp.eq.s32.totalorder %v776, %v798
        %vm809 = vcmp.eq.s32.totalorder %v779, %v798
        %vm810 = vcmp.eq.s32.totalorder %v782, %v798
        %vm811 = vcmp.eq.s32.totalorder %v785, %v798
        %vm812 = vcmp.eq.s32.totalorder %v788, %v798
        %vm813 = vcmp.eq.s32.totalorder %v791, %v798
        %vm814 = vcmp.eq.s32.totalorder %v794, %v798
        %v815 = vsel %vm799, %v652, -1e+30
        %v816 = vsel %vm800, %v657, -1e+30
        %v817 = vsel %vm801, %v662, -1e+30
        %v818 = vsel %vm802, %v667, -1e+30
        %v819 = vsel %vm803, %v672, -1e+30
        %v820 = vsel %vm804, %v677, -1e+30
        %v821 = vsel %vm805, %v682, -1e+30
        %v822 = vsel %vm806, %v687, -1e+30
        %v823 = vsel %vm807, %v692, -1e+30
        %v824 = vsel %vm808, %v697, -1e+30
        %v825 = vsel %vm809, %v702, -1e+30
        %v826 = vsel %vm810, %v707, -1e+30
        %v827 = vsel %vm811, %v712, -1e+30
        %v828 = vsel %vm812, %v717, -1e+30
        %v829 = vsel %vm813, %v722, -1e+30
        %v830 = vsel %vm814, %v727, -1e+30
        %831 = vmax.xlane.f32.xlu0 %v815
        %v832 = vpop.xlane.xlu0 %831
        %833 = vmax.xlane.f32.xlu0 %v816
        %v834 = vpop.xlane.xlu0 %833
        %835 = vmax.xlane.f32.xlu0 %v817
        %v836 = vpop.xlane.xlu0 %835
        %837 = vmax.xlane.f32.xlu0 %v818
        %v838 = vpop.xlane.xlu0 %837
        %839 = vmax.xlane.f32.xlu0 %v819
        %v840 = vpop.xlane.xlu0 %839
        %841 = vmax.xlane.f32.xlu0 %v820
        %v842 = vpop.xlane.xlu0 %841
        %843 = vmax.xlane.f32.xlu0 %v821
        %v844 = vpop.xlane.xlu0 %843
        %845 = vmax.xlane.f32.xlu0 %v822
        %v846 = vpop.xlane.xlu0 %845
        %847 = vmax.xlane.f32.xlu0 %v823
        %v848 = vpop.xlane.xlu0 %847
        %849 = vmax.xlane.f32.xlu0 %v824
        %v850 = vpop.xlane.xlu0 %849
        %851 = vmax.xlane.f32.xlu0 %v825
        %v852 = vpop.xlane.xlu0 %851
        %853 = vmax.xlane.f32.xlu0 %v826
        %v854 = vpop.xlane.xlu0 %853
        %855 = vmax.xlane.f32.xlu0 %v827
        %v856 = vpop.xlane.xlu0 %855
        %857 = vmax.xlane.f32.xlu0 %v828
        %v858 = vpop.xlane.xlu0 %857
        %859 = vmax.xlane.f32.xlu0 %v829
        %v860 = vpop.xlane.xlu0 %859
        %861 = vmax.xlane.f32.xlu0 %v830
        %v862 = vpop.xlane.xlu0 %861
        %v863 = vsub.f32 %v815, %v832
        %v864 = vsub.f32 %v816, %v834
        %v865 = vsub.f32 %v817, %v836
        %v866 = vsub.f32 %v818, %v838
        %v867 = vsub.f32 %v819, %v840
        %v868 = vsub.f32 %v820, %v842
        %v869 = vsub.f32 %v821, %v844
        %v870 = vsub.f32 %v822, %v846
        %v871 = vsub.f32 %v823, %v848
        %v872 = vsub.f32 %v824, %v850
        %v873 = vsub.f32 %v825, %v852
        %v874 = vsub.f32 %v826, %v854
        %v875 = vsub.f32 %v827, %v856
        %v876 = vsub.f32 %v828, %v858
        %v877 = vsub.f32 %v829, %v860
        %v878 = vsub.f32 %v830, %v862
        %v879 = vmul.f32 %v863, 1.442695
        %v880 = vpow.pop %v879
        %v881 = vmul.f32 %v864, 1.442695
        %v882 = vpow.pop %v881
        %v883 = vmul.f32 %v865, 1.442695
        %v884 = vpow.pop %v883
        %v885 = vmul.f32 %v866, 1.442695
        %v886 = vpow.pop %v885
        %v887 = vmul.f32 %v867, 1.442695
        %v888 = vpow.pop %v887
        %v889 = vmul.f32 %v868, 1.442695
        %v890 = vpow.pop %v889
        %v891 = vmul.f32 %v869, 1.442695
        %v892 = vpow.pop %v891
        %v893 = vmul.f32 %v870, 1.442695
        %v894 = vpow.pop %v893
        %v895 = vmul.f32 %v871, 1.442695
        %v896 = vpow.pop %v895
        %v897 = vmul.f32 %v872, 1.442695
        %v898 = vpow.pop %v897
        %v899 = vmul.f32 %v873, 1.442695
        %v900 = vpow.pop %v899
        %v901 = vmul.f32 %v874, 1.442695
        %v902 = vpow.pop %v901
        %v903 = vmul.f32 %v875, 1.442695
        %v904 = vpow.pop %v903
        %v905 = vmul.f32 %v876, 1.442695
        %v906 = vpow.pop %v905
        %v907 = vmul.f32 %v877, 1.442695
        %v908 = vpow.pop %v907
        %v909 = vmul.f32 %v878, 1.442695
        %v910 = vpow.pop %v909
        %911 = vadd.xlane.f32.xlu0 %v880
        %v912 = vpop.xlane.xlu0 %911
        %913 = vadd.xlane.f32.xlu0 %v882
        %v914 = vpop.xlane.xlu0 %913
        %915 = vadd.xlane.f32.xlu0 %v884
        %v916 = vpop.xlane.xlu0 %915
        %917 = vadd.xlane.f32.xlu0 %v886
        %v918 = vpop.xlane.xlu0 %917
        %919 = vadd.xlane.f32.xlu0 %v888
        %v920 = vpop.xlane.xlu0 %919
        %921 = vadd.xlane.f32.xlu0 %v890
        %v922 = vpop.xlane.xlu0 %921
        %923 = vadd.xlane.f32.xlu0 %v892
        %v924 = vpop.xlane.xlu0 %923
        %925 = vadd.xlane.f32.xlu0 %v894
        %v926 = vpop.xlane.xlu0 %925
        %927 = vadd.xlane.f32.xlu0 %v896
        %v928 = vpop.xlane.xlu0 %927
        %929 = vadd.xlane.f32.xlu0 %v898
        %v930 = vpop.xlane.xlu0 %929
        %931 = vadd.xlane.f32.xlu0 %v900
        %v932 = vpop.xlane.xlu0 %931
        %933 = vadd.xlane.f32.xlu0 %v902
        %v934 = vpop.xlane.xlu0 %933
        %935 = vadd.xlane.f32.xlu0 %v904
        %v936 = vpop.xlane.xlu0 %935
        %937 = vadd.xlane.f32.xlu0 %v906
        %v938 = vpop.xlane.xlu0 %937
        %939 = vadd.xlane.f32.xlu0 %v908
        %v940 = vpop.xlane.xlu0 %939
        %941 = vadd.xlane.f32.xlu0 %v910
        %v942 = vpop.xlane.xlu0 %941
        %v943 = vrcp.pop %v912
        %v944 = vrcp.pop %v914
        %v945 = vrcp.pop %v916
        %v946 = vrcp.pop %v918
        %v947 = vrcp.pop %v920
        %v948 = vrcp.pop %v922
        %v949 = vrcp.pop %v924
        %v950 = vrcp.pop %v926
        %v951 = vrcp.pop %v928
        %v952 = vrcp.pop %v930
        %v953 = vrcp.pop %v932
        %v954 = vrcp.pop %v934
        %v955 = vrcp.pop %v936
        %v956 = vrcp.pop %v938
        %v957 = vrcp.pop %v940
        %v958 = vrcp.pop %v942
        %v959 = vmul.f32 %v880, %v943
        %v960 = vmul.f32 %v882, %v944
        %v961 = vmul.f32 %v884, %v945
        %v962 = vmul.f32 %v886, %v946
        %v963 = vmul.f32 %v888, %v947
        %v964 = vmul.f32 %v890, %v948
        %v965 = vmul.f32 %v892, %v949
        %v966 = vmul.f32 %v894, %v950
        %v967 = vmul.f32 %v896, %v951
        %v968 = vmul.f32 %v898, %v952
        %v969 = vmul.f32 %v900, %v953
        %v970 = vmul.f32 %v902, %v954
        %v971 = vmul.f32 %v904, %v955
        %v972 = vmul.f32 %v906, %v956
        %v973 = vmul.f32 %v908, %v957
        %v974 = vmul.f32 %v910, %v958
        %v976 = vrot.slane %v497, 4
        %978 = vmatprep.subr.mxu0 0.0
        %979 = vmatpush1.xpose.msra.mxu0 %v959
        %980 = vmatprep.subr.mxu0 0.0
        %981 = vmatpush1.xpose.msra.mxu0 %v960
        %982 = vmatprep.subr.mxu0 0.0
        %983 = vmatpush1.xpose.msra.mxu0 %v961
        %984 = vmatprep.subr.mxu0 0.0
        %985 = vmatpush1.xpose.msra.mxu0 %v962
        %986 = vmatprep.subr.mxu0 0.0
        %987 = vmatpush1.xpose.msra.mxu0 %v963
        %988 = vmatprep.subr.mxu0 0.0
        %989 = vmatpush1.xpose.msra.mxu0 %v964
        %990 = vmatprep.subr.mxu0 0.0
        %991 = vmatpush1.xpose.msra.mxu0 %v965
        %992 = vmatprep.subr.mxu0 0.0
        %993 = vmatpush1.xpose.msra.mxu0 %v966
        %994 = vmatprep.subr.mxu0 0.0
        %995 = vmatpush1.xpose.msra.mxu0 %v967
        %996 = vmatprep.subr.mxu0 0.0
        %997 = vmatpush1.xpose.msra.mxu0 %v968
        %998 = vmatprep.subr.mxu0 0.0
        %999 = vmatpush1.xpose.msra.mxu0 %v969
        %1000 = vmatprep.subr.mxu0 0.0
        %1001 = vmatpush1.xpose.msra.mxu0 %v970
        %1002 = vmatprep.subr.mxu0 0.0
        %1003 = vmatpush1.xpose.msra.mxu0 %v971
        %1004 = vmatprep.subr.mxu0 0.0
        %1005 = vmatpush1.xpose.msra.mxu0 %v972
        %1006 = vmatprep.subr.mxu0 0.0
        %1007 = vmatpush1.xpose.msra.mxu0 %v973
        %1008 = vmatprep.subr.mxu0 0.0
        %1009 = vmatpush1.xpose.msra.mxu0 %v974
        %1010 = vmatprep.subr.mxu0 0.0
        %1011 = vmatpush1.xpose.msra.mxu0 0.0
        %1012 = vmatprep.subr.mxu0 0.0
        %1013 = vmatpush1.xpose.msra.mxu0 0.0
        %1014 = vmatprep.subr.mxu0 0.0
        %1015 = vmatpush1.xpose.msra.mxu0 0.0
        %1016 = vmatprep.subr.mxu0 0.0
        %1017 = vmatpush1.xpose.msra.mxu0 0.0
        %1018 = vmatprep.subr.mxu0 0.0
        %1019 = vmatpush1.xpose.msra.mxu0 0.0
        %1020 = vmatprep.subr.mxu0 0.0
        %1021 = vmatpush1.xpose.msra.mxu0 0.0
        %1022 = vmatprep.subr.mxu0 0.0
        %1023 = vmatpush1.xpose.msra.mxu0 0.0
        %1024 = vmatprep.subr.mxu0 0.0
        %1025 = vmatpush1.xpose.msra.mxu0 0.0
        %1026 = vmatprep.subr.mxu0 0.0
        %1027 = vmatpush1.xpose.msra.mxu0 0.0
        %1028 = vmatprep.subr.mxu0 0.0
        %1029 = vmatpush1.xpose.msra.mxu0 0.0
        %1030 = vmatprep.subr.mxu0 0.0
        %1031 = vmatpush1.xpose.msra.mxu0 0.0
        %1032 = vmatprep.subr.mxu0 0.0
        %1033 = vmatpush1.xpose.msra.mxu0 0.0
        %1034 = vmatprep.subr.mxu0 0.0
        %1035 = vmatpush1.xpose.msra.mxu0 0.0
        %1036 = vmatprep.subr.mxu0 0.0
        %1037 = vmatpush1.xpose.msra.mxu0 0.0
        %1038 = vmatprep.subr.mxu0 0.0
        %1039 = vmatpush1.xpose.msra.mxu0 0.0
        %1040 = vmatprep.subr.mxu0 0.0
        %1041 = vmatpush1.xpose.msra.mxu0 0.0
        %1042 = vmatprep.mubr.f32.mxu0 0.0
        %1043 = vmatmul.mubr.f32.gmra.mrb[0].mxu0 %v976
        %v1044 = vpop.f32.mrb[0].mxu0
        %v1045 = vadd.f32 0.0, %v1044
        %v1046 = vpop.f32.mrb[0].mxu0
        %1047 = vdwg.mxu0
        %v1048 = vmax.f32 %v815, %v819
        %v1049 = vmax.f32 %v816, %v820
        %v1050 = vmax.f32 %v817, %v821
        %v1051 = vmax.f32 %v818, %v822
        %v1052 = vmax.f32 %v1048, %v823
        %v1053 = vmax.f32 %v1049, %v824
        %v1054 = vmax.f32 %v1050, %v825
        %v1055 = vmax.f32 %v1051, %v826
        %v1056 = vmax.f32 %v1052, %v827
        %v1057 = vmax.f32 %v1053, %v828
        %v1058 = vmax.f32 %v1054, %v829
        %v1059 = vmax.f32 %v1055, %v830
        %v1060 = vmax.f32 %v1056, %v1057
        %v1061 = vmax.f32 %v1058, %v1059
        %v1062 = vmax.f32 %v1060, %v1061
        %v1063 = vrot.slane %v1062, 4
        %v1064 = vmax.f32 %v1062, %v1063
        %v1065 = vrot.slane %v1064, 2
        %v1066 = vmax.f32 %v1064, %v1065
        %v1067 = vrot.slane %v1066, 1
        %v1068 = vmax.f32 %v1066, %v1067
        %v1069 = vsub.f32 %v815, %v1068
        %v1070 = vsub.f32 %v816, %v1068
        %v1071 = vsub.f32 %v817, %v1068
        %v1072 = vsub.f32 %v818, %v1068
        %v1073 = vsub.f32 %v819, %v1068
        %v1074 = vsub.f32 %v820, %v1068
        %v1075 = vsub.f32 %v821, %v1068
        %v1076 = vsub.f32 %v822, %v1068
        %v1077 = vsub.f32 %v823, %v1068
        %v1078 = vsub.f32 %v824, %v1068
        %v1079 = vsub.f32 %v825, %v1068
        %v1080 = vsub.f32 %v826, %v1068
        %v1081 = vsub.f32 %v827, %v1068
        %v1082 = vsub.f32 %v828, %v1068
        %v1083 = vsub.f32 %v829, %v1068
        %v1084 = vsub.f32 %v830, %v1068
        %v1085 = vmul.f32 %v1069, 1.442695
        %v1086 = vpow.pop %v1085
        %v1087 = vmul.f32 %v1070, 1.442695
        %v1088 = vpow.pop %v1087
        %v1089 = vmul.f32 %v1071, 1.442695
        %v1090 = vpow.pop %v1089
        %v1091 = vmul.f32 %v1072, 1.442695
        %v1092 = vpow.pop %v1091
        %v1093 = vmul.f32 %v1073, 1.442695
        %v1094 = vpow.pop %v1093
        %v1095 = vmul.f32 %v1074, 1.442695
        %v1096 = vpow.pop %v1095
        %v1097 = vmul.f32 %v1075, 1.442695
        %v1098 = vpow.pop %v1097
        %v1099 = vmul.f32 %v1076, 1.442695
        %v1100 = vpow.pop %v1099
        %v1101 = vmul.f32 %v1077, 1.442695
        %v1102 = vpow.pop %v1101
        %v1103 = vmul.f32 %v1078, 1.442695
        %v1104 = vpow.pop %v1103
        %v1105 = vmul.f32 %v1079, 1.442695
        %v1106 = vpow.pop %v1105
        %v1107 = vmul.f32 %v1080, 1.442695
        %v1108 = vpow.pop %v1107
        %v1109 = vmul.f32 %v1081, 1.442695
        %v1110 = vpow.pop %v1109
        %v1111 = vmul.f32 %v1082, 1.442695
        %v1112 = vpow.pop %v1111
        %v1113 = vmul.f32 %v1083, 1.442695
        %v1114 = vpow.pop %v1113
        %v1115 = vmul.f32 %v1084, 1.442695
        %v1116 = vpow.pop %v1115
        %v1117 = vadd.f32 %v1086, %v1088
        %v1118 = vadd.f32 %v1117, %v1090
        %v1119 = vadd.f32 %v1118, %v1092
        %v1120 = vadd.f32 %v1119, %v1094
        %v1121 = vadd.f32 %v1120, %v1096
        %v1122 = vadd.f32 %v1121, %v1098
        %v1123 = vadd.f32 %v1122, %v1100
        %v1124 = vadd.f32 %v1123, %v1102
        %v1125 = vadd.f32 %v1124, %v1104
        %v1126 = vadd.f32 %v1125, %v1106
        %v1127 = vadd.f32 %v1126, %v1108
        %v1128 = vadd.f32 %v1127, %v1110
        %v1129 = vadd.f32 %v1128, %v1112
        %v1130 = vadd.f32 %v1129, %v1114
        %v1131 = vadd.f32 %v1130, %v1116
        %v1132 = vrot.slane %v1131, 4
        %v1133 = vadd.f32 %v1131, %v1132
        %v1134 = vrot.slane %v1133, 2
        %v1135 = vadd.f32 %v1133, %v1134
        %v1136 = vrot.slane %v1135, 1
        %v1137 = vadd.f32 %v1135, %v1136
        %v1138 = vrcp.pop %v1137
        %v1139 = vmul.f32 %v1086, %v1138
        %v1140 = vmul.f32 %v1088, %v1138
        %v1141 = vmul.f32 %v1090, %v1138
        %v1142 = vmul.f32 %v1092, %v1138
        %v1143 = vmul.f32 %v1094, %v1138
        %v1144 = vmul.f32 %v1096, %v1138
        %v1145 = vmul.f32 %v1098, %v1138
        %v1146 = vmul.f32 %v1100, %v1138
        %v1147 = vmul.f32 %v1102, %v1138
        %v1148 = vmul.f32 %v1104, %v1138
        %v1149 = vmul.f32 %v1106, %v1138
        %v1150 = vmul.f32 %v1108, %v1138
        %v1151 = vmul.f32 %v1110, %v1138
        %v1152 = vmul.f32 %v1112, %v1138
        %v1153 = vmul.f32 %v1114, %v1138
        %v1154 = vmul.f32 %v1116, %v1138
        %1155 = vmatprep.subr.mxu0 0.0
        %1156 = vmatpush1.msra.mxu0 %v1139
        %1157 = vmatprep.subr.mxu0 0.0
        %1158 = vmatpush1.msra.mxu0 %v1140
        %1159 = vmatprep.subr.mxu0 0.0
        %1160 = vmatpush1.msra.mxu0 %v1141
        %1161 = vmatprep.subr.mxu0 0.0
        %1162 = vmatpush1.msra.mxu0 %v1142
        %1163 = vmatprep.subr.mxu0 0.0
        %1164 = vmatpush1.msra.mxu0 %v1143
        %1165 = vmatprep.subr.mxu0 0.0
        %1166 = vmatpush1.msra.mxu0 %v1144
        %1167 = vmatprep.subr.mxu0 0.0
        %1168 = vmatpush1.msra.mxu0 %v1145
        %1169 = vmatprep.subr.mxu0 0.0
        %1170 = vmatpush1.msra.mxu0 %v1146
        %1171 = vmatprep.subr.mxu0 0.0
        %1172 = vmatpush1.msra.mxu0 %v1147
        %1173 = vmatprep.subr.mxu0 0.0
        %1174 = vmatpush1.msra.mxu0 %v1148
        %1175 = vmatprep.subr.mxu0 0.0
        %1176 = vmatpush1.msra.mxu0 %v1149
        %1177 = vmatprep.subr.mxu0 0.0
        %1178 = vmatpush1.msra.mxu0 %v1150
        %1179 = vmatprep.subr.mxu0 0.0
        %1180 = vmatpush1.msra.mxu0 %v1151
        %1181 = vmatprep.subr.mxu0 0.0
        %1182 = vmatpush1.msra.mxu0 %v1152
        %1183 = vmatprep.subr.mxu0 0.0
        %1184 = vmatpush1.msra.mxu0 %v1153
        %1185 = vmatprep.subr.mxu0 0.0
        %1186 = vmatpush1.msra.mxu0 %v1154
        %1187 = vmatprep.subr.mxu0 0.0
        %1188 = vmatpush1.msra.mxu0 0.0
        %1189 = vmatprep.subr.mxu0 0.0
        %1190 = vmatpush1.msra.mxu0 0.0
        %1191 = vmatprep.subr.mxu0 0.0
        %1192 = vmatpush1.msra.mxu0 0.0
        %1193 = vmatprep.subr.mxu0 0.0
        %1194 = vmatpush1.msra.mxu0 0.0
        %1195 = vmatprep.subr.mxu0 0.0
        %1196 = vmatpush1.msra.mxu0 0.0
        %1197 = vmatprep.subr.mxu0 0.0
        %1198 = vmatpush1.msra.mxu0 0.0
        %1199 = vmatprep.subr.mxu0 0.0
        %1200 = vmatpush1.msra.mxu0 0.0
        %1201 = vmatprep.subr.mxu0 0.0
        %1202 = vmatpush1.msra.mxu0 0.0
        %1203 = vmatprep.subr.mxu0 0.0
        %1204 = vmatpush1.msra.mxu0 0.0
        %1205 = vmatprep.subr.mxu0 0.0
        %1206 = vmatpush1.msra.mxu0 0.0
        %1207 = vmatprep.subr.mxu0 0.0
        %1208 = vmatpush1.msra.mxu0 0.0
        %1209 = vmatprep.subr.mxu0 0.0
        %1210 = vmatpush1.msra.mxu0 0.0
        %1211 = vmatprep.subr.mxu0 0.0
        %1212 = vmatpush1.msra.mxu0 0.0
        %1213 = vmatprep.subr.mxu0 0.0
        %1214 = vmatpush1.msra.mxu0 0.0
        %1215 = vmatprep.subr.mxu0 0.0
        %1216 = vmatpush1.msra.mxu0 0.0
        %1217 = vmatprep.subr.mxu0 0.0
        %1218 = vmatpush1.msra.mxu0 0.0
        %1219 = vmatprep.mubr.f32.mxu0 0.0
        %1220 = vmatmul.mubr.f32.gmra.mrb[0].mxu0 %v497
        %v1221 = vpop.f32.mrb[0].mxu0
        %v1222 = vadd.f32 0.0, %v1221
        %v1223 = vpop.f32.mrb[0].mxu0
        %1224 = vdwg.mxu0
        %1225 = vset.pattern.permute.xlu0 2
        %1226 = vperm.xlu0 %1225, %v335
        %v1227 = vpop.permute.xlu0 %1226
        %v1229 = vmul.f32 %v1227, %v1045
        %v1230 = vadd.f32 %v333, %v1229
        %v1232 = vrot.slane %v1222, 4
        %v1234 = vmul.f32 %v1227, %v1232
        %v1236 = vrot.slane %v1234, 4
        %v1238 = vadd.f32 %v334, %v1236
        %v1240 = vrot.slane %v1238, 4
        %v1242 = vsel %vm336, %v1230, %v1240
        %1243 = vst [vmem:[%s316] sm:$0xff] %v1242
        %s1244 = sand.u32 %s204, 1
        %s1245 = scalar_lea.sflag [#allocation3], %s1244
        %s1246 = sand.u32 %s204, 1
        %s1247 = smul.addr %s1246, 8
        %s1248 = scalar_lea.vmem [#allocation2], %s1247
        // Predicated region
        $region49: #{tpu_custom_call.1} parent=47 // pred_check
          %p1249 = pneg %p214
        $region50: #{tpu_custom_call.1} parent=47 // pred_check_branch
          %1251 = sbr.rel (%p1249) target = $region52
        $region51: #{tpu_custom_call.1} parent=47 // pred_region
          %s1253 = ssub.s32 128, 128
          %1254 = vsyncadd %s1245, %s1253
          %s1255 = smul.addr %s25, 2
          %s1256 = sadd.s32 %s26, %s1255
          %s1257 = smul.addr %s1256, 128
          %s1258 = scalar_lea.hbm %s7, %s1257
          %s1260 = sshll.u32 %s1248, 4
          %s1261 = int_to_ptr.vmem [resolvable:$true] %s1260
          %1263 = dma.vmem_to_hbm [thread:$0]  %s1261, 128, %s1258, %s1245
        $region52: #{tpu_custom_call.1} parent=47 // pred_fallthru
          _
      $region48: #{tpu_custom_call.1} parent=5 // pred_fallthru
        _
      %p1264 = scmp.le.s32.totalorder 2, %s16
      // Predicated region
      $region53: #{tpu_custom_call.1} parent=5 // pred_check
        %p1265 = pneg %p1264
      $region54: #{tpu_custom_call.1} parent=5 // pred_check_branch
        %1267 = sbr.rel (%p1265) target = $region56
      $region55: #{tpu_custom_call.1} parent=5 // pred_region
        %s1268 = ssub.s32 %s16, 2
        // Predicated region
        $region57: #{tpu_custom_call.1} parent=55 // pred_check
          %p1269 = pneg %p220
        $region58: #{tpu_custom_call.1} parent=55 // pred_check_branch
          %1271 = sbr.rel (%p1269) target = $region60
        $region59: #{tpu_custom_call.1} parent=55 // pred_region
          %s1272 = sand.u32 %s205, 1
          %s1273 = scalar_lea.sflag [#allocation3], %s1272
          %s1274 = sand.u32 %s205, 1
          %s1275 = smul.addr %s1274, 8
          %s1276 = scalar_lea.vmem [#allocation2], %s1275
          %1277 = dma.done %s1273, 128
        $region60: #{tpu_custom_call.1} parent=55 // pred_fallthru
          _
      $region56: #{tpu_custom_call.1} parent=5 // pred_fallthru
        _
    $region6: #{tpu_custom_call.1} parent=1 // loop_footer
      %s20 = sadd.s32 1, %s16
    $region7: #{tpu_custom_call.1} parent=1 // loop_footer_branch
      %15 = sbr.rel target = $region3
    $region8: #{tpu_custom_call.1} parent=1 // loop_exit
      _
    %1278 = vsyncpa [#allocation3], 1
    %s1279 = scalar_lea.sflag [#allocation3], 1
    %1280 = vsyncpa %s1279, 1

</llo_original>
